<compile_context>
chip_gen: v7x
topology: tpu7x:2x2x1
jax: 0.10.0
libtpu: 0.0.40
codegen_flags: <defaults>
</compile_context>

<pallas_src>
import functools

import jax
import jax.numpy as jnp
import numpy as np
from jax.experimental import pallas as pl
from jax.experimental.pallas import tpu as pltpu


HIDDEN = 500        # fixed by the PyTorch module (nn.Linear(feature_dim, 500))
HIDDEN_PAD = 512    # lane-aligned hidden size used inside the kernel
LANE = 128
SUBLANE = 8


def _round_up(x, m):
    return ((x + m - 1) // m) * m


def _decoder_kernel(x_ref, w1_ref, b1_ref, w2_ref, b2_ref, o_ref, h_ref):
    # Grid: (batch_tiles [parallel], n_tiles [arbitrary]); j is innermost.
    # x_ref:  (tb, F)            bf16
    # w1_ref: (F, HIDDEN_PAD)    bf16   b1_ref: (1, HIDDEN_PAD) f32
    # w2_ref: (HIDDEN_PAD, tn)   bf16   b2_ref: (1, tn)         f32
    # o_ref:  (tb, tn)           f32
    # h_ref:  (tb, HIDDEN_PAD)   bf16 VMEM scratch (per-batch-tile cache)
    @pl.when(pl.program_id(1) == 0)
    def _():
        h = jnp.dot(x_ref[...], w1_ref[...], preferred_element_type=jnp.float32)
        h = jnp.maximum(h + b1_ref[...], 0.0)          # bias + ReLU in f32
        h_ref[...] = h.astype(h_ref.dtype)             # cache as bf16 for matmul #2

    y = jnp.dot(h_ref[...], w2_ref[...], preferred_element_type=jnp.float32)
    y = y + b2_ref[...]
    o_ref[...] = jax.nn.sigmoid(y).astype(o_ref.dtype)  # sigmoid in f32 (EUP)


def decoder_forward(x, params, input_shape, *, batch_tile=256, n_tile=512):
    """x: (batch, feature_dim) -> (batch, *input_shape)."""
    w1, b1, w2, b2 = params
    batch, feature_dim = x.shape
    input_dim = int(np.prod(input_shape))
    assert w1.shape == (feature_dim, HIDDEN)
    assert w2.shape == (HIDDEN, input_dim)
    assert batch_tile % SUBLANE == 0 and n_tile % LANE == 0

    # ---- lane/sublane-friendly padded sizes & tiles --------------------------
    n_pad = _round_up(input_dim, LANE)
    tn = min(n_tile, n_pad)
    n_pad = _round_up(n_pad, tn)

    tb = min(batch_tile, _round_up(batch, SUBLANE))
    b_pad = _round_up(batch, tb)

    # ---- one-time parameter prep: zero-pad + cast matmul operands to bf16 ----
    w1p = jnp.zeros((feature_dim, HIDDEN_PAD), jnp.bfloat16)
    w1p = w1p.at[:, :HIDDEN].set(w1.astype(jnp.bfloat16))
    b1p = jnp.zeros((1, HIDDEN_PAD), jnp.float32)
    b1p = b1p.at[:, :HIDDEN].set(b1.reshape(1, -1).astype(jnp.float32))
    w2p = jnp.zeros((HIDDEN_PAD, n_pad), jnp.bfloat16)
    w2p = w2p.at[:HIDDEN, :input_dim].set(w2.astype(jnp.bfloat16))
    b2p = jnp.zeros((1, n_pad), jnp.float32)
    b2p = b2p.at[:, :input_dim].set(b2.reshape(1, -1).astype(jnp.float32))

    xp = jnp.zeros((b_pad, feature_dim), jnp.bfloat16)
    xp = xp.at[:batch].set(x.astype(jnp.bfloat16))

    grid = (b_pad // tb, n_pad // tn)

    flops = 2 * b_pad * feature_dim * HIDDEN_PAD + 2 * b_pad * HIDDEN_PAD * n_pad
    bytes_accessed = (
        xp.size * 2 + w1p.size * 2 + b1p.size * 4
        + w2p.size * 2 + b2p.size * 4 + b_pad * n_pad * 4
    )

    out_flat = pl.pallas_call(
        _decoder_kernel,
        out_shape=jax.ShapeDtypeStruct((b_pad, n_pad), jnp.float32),
        grid_spec=pl.GridSpec(
            grid=grid,
            in_specs=[
                pl.BlockSpec((tb, feature_dim), lambda i, j: (i, 0)),
                pl.BlockSpec((feature_dim, HIDDEN_PAD), lambda i, j: (0, 0)),
                pl.BlockSpec((1, HIDDEN_PAD), lambda i, j: (0, 0)),
                pl.BlockSpec((HIDDEN_PAD, tn), lambda i, j: (0, j)),
                pl.BlockSpec((1, tn), lambda i, j: (0, j)),
            ],
            out_specs=pl.BlockSpec((tb, tn), lambda i, j: (i, j)),
            scratch_shapes=[pltpu.VMEM((tb, HIDDEN_PAD), jnp.bfloat16)],
        ),
        compiler_params=pltpu.CompilerParams(
            dimension_semantics=("parallel", "arbitrary"),
            vmem_limit_bytes=48 * 1024 * 1024,
        ),
        cost_estimate=pl.CostEstimate(
            flops=flops,
            transcendentals=b_pad * n_pad,
            bytes_accessed=bytes_accessed,
        ),
    )(xp, w1p, b1p, w2p, b2p)

    # Slice off padding, then apply the Unflatten view (free reshape).
    out = out_flat[:batch, :input_dim]
    return out.reshape((batch,) + tuple(input_shape))


def init_params(key, feature_dim, input_shape):
    """Deterministic synthetic parameters (PyTorch-Linear-like uniform init)."""
    input_dim = int(np.prod(input_shape))
    k1, k2, k3, k4 = jax.random.split(key, 4)
    bound1 = 1.0 / np.sqrt(feature_dim)
    bound2 = 1.0 / np.sqrt(HIDDEN)
    w1 = jax.random.uniform(k1, (feature_dim, HIDDEN), jnp.float32, -bound1, bound1)
    b1 = jax.random.uniform(k2, (HIDDEN,), jnp.float32, -bound1, bound1)
    w2 = jax.random.uniform(k3, (HIDDEN, input_dim), jnp.float32, -bound2, bound2)
    b2 = jax.random.uniform(k4, (input_dim,), jnp.float32, -bound2, bound2)
    return w1, b1, w2, b2


def decoder_reference(x, params, input_shape):
    w1, b1, w2, b2 = params
    h = jnp.maximum(x @ w1 + b1, 0.0)
    y = jax.nn.sigmoid(h @ w2 + b2)
    return y.reshape((-1,) + tuple(input_shape))


if __name__ == "__main__":
    key = jax.random.PRNGKey(0)
    kx, kp = jax.random.split(key)

    input_shape = (4, 16, 16)   # Unflatten target (C, H, W) -> input_dim = 1024
    feature_dim = 32
    batch = 8

    x = jax.random.normal(kx, (batch, feature_dim), jnp.float32)
    params = init_params(kp, feature_dim, input_shape)

    fwd = jax.jit(functools.partial(decoder_forward, input_shape=input_shape))
    out = fwd(x, params)
    out = jax.block_until_ready(out)

    ref = decoder_reference(x, params, input_shape)
    assert out.shape == (batch,) + input_shape, out.shape
    # bf16 matmuls -> looser tolerance vs. the f32 reference.
    np.testing.assert_allclose(np.asarray(out), np.asarray(ref), rtol=3e-2, atol=3e-2)

    print("KERNEL_OK")
</pallas_src>

<mosaic_0001>
module attributes {stable_mosaic.version = 11 : i64} {
  func.func @_decoder_kernel(%arg0: i32, %arg1: i32, %arg2: memref<8x32xbf16, #tpu.memory_space<vmem>>, %arg3: memref<32x512xbf16, #tpu.memory_space<vmem>>, %arg4: memref<1x512xf32, #tpu.memory_space<vmem>>, %arg5: memref<512x512xbf16, #tpu.memory_space<vmem>>, %arg6: memref<1x512xf32, #tpu.memory_space<vmem>>, %arg7: memref<8x512xf32, #tpu.memory_space<vmem>>, %arg8: memref<8x512xbf16, #tpu.memory_space<vmem>>) attributes {dimension_semantics = [#tpu.dimension_semantics<parallel>, #tpu.dimension_semantics<arbitrary>], iteration_bounds = array<i64: 1, 2>, scalar_prefetch = 0 : i64, scratch_operands = 1 : i64, tpu.core_type = #tpu.core_type<tc>, window_params = [{transform_indices = @transform_0, window_bounds = array<i64: 8, 32>}, {pipeline_mode = #tpu.pipeline_mode<synchronous>, transform_indices = @transform_1, window_bounds = array<i64: 32, 512>}, {pipeline_mode = #tpu.pipeline_mode<synchronous>, transform_indices = @transform_2, window_bounds = array<i64: 1, 512>}, {transform_indices = @transform_3, window_bounds = array<i64: 512, 512>}, {transform_indices = @transform_4, window_bounds = array<i64: 1, 512>}, {transform_indices = @transform_5, window_bounds = array<i64: 8, 512>}]} {
    %c0_i32 = arith.constant 0 : i32
    %0 = arith.cmpi eq, %arg1, %c0_i32 : i32
    %1 = arith.extui %0 : i1 to i32
    %c0_i32_0 = arith.constant 0 : i32
    %2 = arith.cmpi ne, %1, %c0_i32_0 : i32
    scf.if %2 {
      %c0_9 = arith.constant 0 : index
      %c0_10 = arith.constant 0 : index
      %15 = vector.load %arg2[%c0_9, %c0_10] : memref<8x32xbf16, #tpu.memory_space<vmem>>, vector<8x32xbf16>
      %c0_11 = arith.constant 0 : index
      %c0_12 = arith.constant 0 : index
      %16 = vector.load %arg3[%c0_11, %c0_12] : memref<32x512xbf16, #tpu.memory_space<vmem>>, vector<32x512xbf16>
      %cst_13 = arith.constant dense<0.000000e+00> : vector<8x512xf32>
      %17 = tpu.matmul %15, %16, %cst_13 {dimension_numbers = #tpu.dot_dimension_numbers<[1], [0], [0], [1], [0, 0, 1, 1], [], []>} : vector<8x32xbf16>, vector<32x512xbf16>, vector<8x512xf32> -> vector<8x512xf32>
      %c0_14 = arith.constant 0 : index
      %c0_15 = arith.constant 0 : index
      %18 = vector.load %arg4[%c0_14, %c0_15] : memref<1x512xf32, #tpu.memory_space<vmem>>, vector<1x512xf32>
      %19 = vector.broadcast %18 : vector<1x512xf32> to vector<8x512xf32>
      %20 = arith.addf %17, %19 : vector<8x512xf32>
      %cst_16 = arith.constant 0.000000e+00 : f32
      %21 = vector.broadcast %cst_16 : f32 to vector<8x512xf32>
      %22 = arith.maximumf %20, %21 : vector<8x512xf32>
      %23 = arith.truncf %22 : vector<8x512xf32> to vector<8x512xbf16>
      %c0_17 = arith.constant 0 : index
      %c0_18 = arith.constant 0 : index
      %24 = vector.load %arg8[%c0_17, %c0_18] : memref<8x512xbf16, #tpu.memory_space<vmem>>, vector<8x512xbf16>
      tpu.vector_store %arg8[%c0_17, %c0_18], %23 {strides = array<i32>} : memref<8x512xbf16, #tpu.memory_space<vmem>>, vector<8x512xbf16>,
    } else {
    }
    %c0 = arith.constant 0 : index
    %c0_1 = arith.constant 0 : index
    %3 = vector.load %arg8[%c0, %c0_1] : memref<8x512xbf16, #tpu.memory_space<vmem>>, vector<8x512xbf16>
    %c0_2 = arith.constant 0 : index
    %c0_3 = arith.constant 0 : index
    %4 = vector.load %arg5[%c0_2, %c0_3] : memref<512x512xbf16, #tpu.memory_space<vmem>>, vector<512x512xbf16>
    %cst = arith.constant dense<0.000000e+00> : vector<8x512xf32>
    %5 = tpu.matmul %3, %4, %cst {dimension_numbers = #tpu.dot_dimension_numbers<[1], [0], [0], [1], [0, 0, 1, 1], [], []>} : vector<8x512xbf16>, vector<512x512xbf16>, vector<8x512xf32> -> vector<8x512xf32>
    %c0_4 = arith.constant 0 : index
    %c0_5 = arith.constant 0 : index
    %6 = vector.load %arg6[%c0_4, %c0_5] : memref<1x512xf32, #tpu.memory_space<vmem>>, vector<1x512xf32>
    %7 = vector.broadcast %6 : vector<1x512xf32> to vector<8x512xf32>
    %8 = arith.addf %5, %7 : vector<8x512xf32>
    %9 = arith.negf %8 : vector<8x512xf32>
    %10 = math.exp %9 : vector<8x512xf32>
    %cst_6 = arith.constant 1.000000e+00 : f32
    %11 = vector.broadcast %cst_6 : f32 to vector<8x512xf32>
    %12 = arith.addf %11, %10 : vector<8x512xf32>
    %13 = arith.divf %11, %12 : vector<8x512xf32>
    %c0_7 = arith.constant 0 : index
    %c0_8 = arith.constant 0 : index
    %14 = vector.load %arg7[%c0_7, %c0_8] : memref<8x512xf32, #tpu.memory_space<vmem>>, vector<8x512xf32>
    tpu.vector_store %arg7[%c0_7, %c0_8], %13 {strides = array<i32>} : memref<8x512xf32, #tpu.memory_space<vmem>>, vector<8x512xf32>,
    return
  }
  func.func @transform_0(%arg0: i32, %arg1: i32) -> (i32, i32) {
    %c0_i32 = arith.constant 0 : i32
    %c0_i32_0 = arith.constant 0 : i32
    return %arg0, %c0_i32 : i32, i32
  }
  func.func @transform_1(%arg0: i32, %arg1: i32) -> (i32, i32) {
    %c0_i32 = arith.constant 0 : i32
    %c0_i32_0 = arith.constant 0 : i32
    %c0_i32_1 = arith.constant 0 : i32
    return %c0_i32, %c0_i32_0 : i32, i32
  }
  func.func @transform_2(%arg0: i32, %arg1: i32) -> (i32, i32) {
    %c0_i32 = arith.constant 0 : i32
    %c0_i32_0 = arith.constant 0 : i32
    %c0_i32_1 = arith.constant 0 : i32
    return %c0_i32, %c0_i32_0 : i32, i32
  }
  func.func @transform_3(%arg0: i32, %arg1: i32) -> (i32, i32) {
    %c0_i32 = arith.constant 0 : i32
    %c0_i32_0 = arith.constant 0 : i32
    return %c0_i32, %arg1 : i32, i32
  }
  func.func @transform_4(%arg0: i32, %arg1: i32) -> (i32, i32) {
    %c0_i32 = arith.constant 0 : i32
    %c0_i32_0 = arith.constant 0 : i32
    return %c0_i32, %arg1 : i32, i32
  }
  func.func @transform_5(%arg0: i32, %arg1: i32) -> (i32, i32) {
    %c0_i32 = arith.constant 0 : i32
    return %arg0, %arg1 : i32, i32
  }
}

</mosaic_0001>

<llo_original>
// kernel: decoder_forward.1
$region0: #{decoder_forward.1}
  #allocation0 [shape = 'u32[]', space=smem, size = 0x4, offset = 0x4, fixed_abs, tag = 'smem constant byte address 0x4 - core index']
  #allocation1 [shape = 'u32[144,128]{1,0:T(1,128)}', space=vmem, size = 0x12000, scoped, tag = 'internal scratch']
  #allocation2 [shape = 'bf16[8,512]{1,0:T(8,128)(2,1)}', space=vmem, size = 0x2000, scoped, tag = 'scratch operand']
  %s0 = inlined_call_operand.vmem [shape: bf16[8,32], index: 0, kind: input, shape index: {}]
  %s1 = inlined_call_operand.vmem [shape: bf16[32,512], index: 1, kind: input, shape index: {}]
  %s2 = inlined_call_operand.vmem [shape: f32[1,512], index: 2, kind: input, shape index: {}]
  %s3 = inlined_call_operand.vmem [shape: bf16[512,1024], index: 3, kind: input, shape index: {}]
  %s4 = inlined_call_operand.vmem [shape: f32[1,1024], index: 4, kind: input, shape index: {}]
  %s5 = inlined_call_operand.vmem [shape: f32[8,1024], index: 5, kind: output, shape index: {}]
  %s6 = sld [smem:[#allocation0]]
  $region80: #{decoder_forward.1} parent=0
    _
  %s8 = ssub.s32 1, %s6
  %s9 = scalar_select 0, %s8, %s6
  $region1: #{decoder_forward.1} parent=0
    #allocation3 [shape = 'u8[1048576]{0}', space=vmem, size = 0x100000, scoped, tag = 'input window, operand 3']
    loop: start=0, step=1, limit=4
    $region2: #{decoder_forward.1} parent=1 // loop_pre_header
      _
    $region3: #{decoder_forward.1} parent=1 // loop_header
      %s11 = sphi 0, %s15
      %p12 = scmp.ge.s32.totalorder %s11, 4
      %s18 = sphi 0, %s30
      %s19 = sphi 0, %s26
      %s20 = sphi 0, %s18
      %s21 = sphi 0, %s19
      %s22 = sphi 0, %s20
      %s23 = sphi 0, %s21
      %s33 = sphi 0, %s35
      %s36 = sphi 0, %s33
      %s37 = sphi 0, %s36
      %s53 = sphi 0, %s37
      %s57 = sphi 0, %s57
      %s59 = sphi 0, %s57
      %s60 = sphi 0, %s59
      %s74 = sphi 0, %s60
      %s78 = sphi 0, %s78
      %s80 = sphi 0, %s78
      %s81 = sphi 0, %s80
      %s95 = sphi 0, %s81
      %s101 = sphi 0, %s103
      %s104 = sphi 0, %s101
      %s105 = sphi 0, %s104
      %s121 = sphi 0, %s105
      %s127 = sphi 0, %s129
      %s130 = sphi 0, %s127
      %s131 = sphi 0, %s130
      %s147 = sphi 0, %s131
      %s155 = sphi 0, %s157
      %s158 = sphi 0, %s155
      %s159 = sphi 0, %s158
      %s175 = sphi 0, %s159
    $region4: #{decoder_forward.1} parent=1 // loop_header_branch
      %14 = sbr.rel (%p12) target = $region8
    $region5: #{decoder_forward.1} parent=1 // loop_body
      %s16 = ssub.s32 %s11, 1
      %s17 = ssub.s32 %s11, 2
      %s24 = sadd.s32 1, %s19
      %p25 = scmp.ge.s32.totalorder %s24, 2
      %s26 = scalar_select %p25, 0, %s24
      %s27 = sadd.s32 1, %s18
      %s28 = scalar_select %p25, %s27, %s18
      %p29 = scmp.ge.s32.totalorder %s28, 1
      %s30 = scalar_select %p29, 0, %s28
      %s31 = ssub.s32 %s18, %s30
      %p32 = scmp.eq.s32.totalorder %s31, 0
      %s34 = sadd.s32 %s33, 1
      %s35 = scalar_select %p32, %s33, %s34
      %p38 = pneg %p32
      %p39 = scmp.eq.s32.totalorder %s11, 1
      %p40 = por %p38, %p39
      %p41 = scmp.ne.s32.totalorder %s33, %s36
      %p42 = scmp.eq.s32.totalorder %s11, 0
      %p43 = por %p41, %p42
      %p44 = scmp.ne.s32.totalorder %s33, %s36
      %p45 = scmp.eq.s32.totalorder %s16, 1
      %p46 = por %p44, %p45
      %p47 = scmp.ne.s32.totalorder %s36, %s37
      %p48 = scmp.eq.s32.totalorder %s16, 0
      %p49 = por %p47, %p48
      %p50 = scmp.ne.s32.totalorder %s36, %s37
      %p51 = scmp.eq.s32.totalorder %s17, 1
      %p52 = por %p50, %p51
      %p54 = scmp.ne.s32.totalorder %s37, %s53
      %p55 = scmp.eq.s32.totalorder %s17, 0
      %p56 = por %p54, %p55
      %s58 = sadd.s32 %s57, 1
      %p61 = scmp.eq.s32.totalorder %s11, 1
      %p62 = scmp.ne.s32.totalorder %s57, %s59
      %p63 = scmp.eq.s32.totalorder %s11, 0
      %p64 = por %p62, %p63
      %p65 = scmp.ne.s32.totalorder %s57, %s59
      %p66 = scmp.eq.s32.totalorder %s16, 1
      %p67 = por %p65, %p66
      %p68 = scmp.ne.s32.totalorder %s59, %s60
      %p69 = scmp.eq.s32.totalorder %s16, 0
      %p70 = por %p68, %p69
      %p71 = scmp.ne.s32.totalorder %s59, %s60
      %p72 = scmp.eq.s32.totalorder %s17, 1
      %p73 = por %p71, %p72
      %p75 = scmp.ne.s32.totalorder %s60, %s74
      %p76 = scmp.eq.s32.totalorder %s17, 0
      %p77 = por %p75, %p76
      %s79 = sadd.s32 %s78, 1
      %p82 = scmp.eq.s32.totalorder %s11, 1
      %p83 = scmp.ne.s32.totalorder %s78, %s80
      %p84 = scmp.eq.s32.totalorder %s11, 0
      %p85 = por %p83, %p84
      %p86 = scmp.ne.s32.totalorder %s78, %s80
      %p87 = scmp.eq.s32.totalorder %s16, 1
      %p88 = por %p86, %p87
      %p89 = scmp.ne.s32.totalorder %s80, %s81
      %p90 = scmp.eq.s32.totalorder %s16, 0
      %p91 = por %p89, %p90
      %p92 = scmp.ne.s32.totalorder %s80, %s81
      %p93 = scmp.eq.s32.totalorder %s17, 1
      %p94 = por %p92, %p93
      %p96 = scmp.ne.s32.totalorder %s81, %s95
      %p97 = scmp.eq.s32.totalorder %s17, 0
      %p98 = por %p96, %p97
      %s99 = ssub.s32 %s19, %s26
      %p100 = scmp.eq.s32.totalorder %s99, 0
      %s102 = sadd.s32 %s101, 1
      %s103 = scalar_select %p100, %s101, %s102
      %p106 = pneg %p100
      %p107 = scmp.eq.s32.totalorder %s11, 1
      %p108 = por %p106, %p107
      %p109 = scmp.ne.s32.totalorder %s101, %s104
      %p110 = scmp.eq.s32.totalorder %s11, 0
      %p111 = por %p109, %p110
      %p112 = scmp.ne.s32.totalorder %s101, %s104
      %p113 = scmp.eq.s32.totalorder %s16, 1
      %p114 = por %p112, %p113
      %p115 = scmp.ne.s32.totalorder %s104, %s105
      %p116 = scmp.eq.s32.totalorder %s16, 0
      %p117 = por %p115, %p116
      %p118 = scmp.ne.s32.totalorder %s104, %s105
      %p119 = scmp.eq.s32.totalorder %s17, 1
      %p120 = por %p118, %p119
      %p122 = scmp.ne.s32.totalorder %s105, %s121
      %p123 = scmp.eq.s32.totalorder %s17, 0
      %p124 = por %p122, %p123
      %s125 = ssub.s32 %s19, %s26
      %p126 = scmp.eq.s32.totalorder %s125, 0
      %s128 = sadd.s32 %s127, 1
      %s129 = scalar_select %p126, %s127, %s128
      %p132 = pneg %p126
      %p133 = scmp.eq.s32.totalorder %s11, 1
      %p134 = por %p132, %p133
      %p135 = scmp.ne.s32.totalorder %s127, %s130
      %p136 = scmp.eq.s32.totalorder %s11, 0
      %p137 = por %p135, %p136
      %p138 = scmp.ne.s32.totalorder %s127, %s130
      %p139 = scmp.eq.s32.totalorder %s16, 1
      %p140 = por %p138, %p139
      %p141 = scmp.ne.s32.totalorder %s130, %s131
      %p142 = scmp.eq.s32.totalorder %s16, 0
      %p143 = por %p141, %p142
      %p144 = scmp.ne.s32.totalorder %s130, %s131
      %p145 = scmp.eq.s32.totalorder %s17, 1
      %p146 = por %p144, %p145
      %p148 = scmp.ne.s32.totalorder %s131, %s147
      %p149 = scmp.eq.s32.totalorder %s17, 0
      %p150 = por %p148, %p149
      %s151 = ssub.s32 %s18, %s30
      %s152 = ssub.s32 %s19, %s26
      %s153 = sor.u32 %s151, %s152
      %p154 = scmp.eq.s32.totalorder %s153, 0
      %s156 = sadd.s32 %s155, 1
      %s157 = scalar_select %p154, %s155, %s156
      %p160 = pneg %p154
      %p161 = scmp.eq.s32.totalorder %s11, 1
      %p162 = por %p160, %p161
      %p163 = scmp.ne.s32.totalorder %s155, %s158
      %p164 = scmp.eq.s32.totalorder %s11, 0
      %p165 = por %p163, %p164
      %p166 = scmp.ne.s32.totalorder %s155, %s158
      %p167 = scmp.eq.s32.totalorder %s16, 1
      %p168 = por %p166, %p167
      %p169 = scmp.ne.s32.totalorder %s158, %s159
      %p170 = scmp.eq.s32.totalorder %s16, 0
      %p171 = por %p169, %p170
      %p172 = scmp.ne.s32.totalorder %s158, %s159
      %p173 = scmp.eq.s32.totalorder %s17, 1
      %p174 = por %p172, %p173
      %p176 = scmp.ne.s32.totalorder %s159, %s175
      %p177 = scmp.eq.s32.totalorder %s17, 0
      %p178 = por %p176, %p177
      %p179 = scmp.le.s32.totalorder 1, %s11
      %p180 = scmp.lt.s32.totalorder %s11, 3
      %p181 = pnand %p179, %p180
      %p182 = pneg %p181
      // Predicated region
      $region9: #{decoder_forward.1} parent=5 // pred_check
        _
      $region10: #{decoder_forward.1} parent=5 // pred_check_branch
        %184 = sbr.rel (%p181) target = $region12
      $region11: #{decoder_forward.1} parent=5 // pred_region
        %s185 = ssub.s32 %s11, 1
        // Predicated region
        $region13: #{decoder_forward.1} parent=11 // pred_check
          %p186 = pneg %p49
        $region14: #{decoder_forward.1} parent=11 // pred_check_branch
          %188 = sbr.rel (%p186) target = $region16
        $region15: #{decoder_forward.1} parent=11 // pred_region
          %p189 = scmp.lt.s32.totalorder %s20, 0
          %s190 = scalar_select %p189, %s20, 0
          %s191 = smul.addr %s190, 4
          %s192 = scalar_lea.vmem %s0, %s191
        $region16: #{decoder_forward.1} parent=11 // pred_fallthru
          _
        // Predicated region
        $region17: #{decoder_forward.1} parent=11 // pred_check
          %p193 = pneg %p70
        $region18: #{decoder_forward.1} parent=11 // pred_check_branch
          %195 = sbr.rel (%p193) target = $region20
        $region19: #{decoder_forward.1} parent=11 // pred_region
          _
        $region20: #{decoder_forward.1} parent=11 // pred_fallthru
          _
        // Predicated region
        $region21: #{decoder_forward.1} parent=11 // pred_check
          %p196 = pneg %p91
        $region22: #{decoder_forward.1} parent=11 // pred_check_branch
          %198 = sbr.rel (%p196) target = $region24
        $region23: #{decoder_forward.1} parent=11 // pred_region
          _
        $region24: #{decoder_forward.1} parent=11 // pred_fallthru
          _
      $region12: #{decoder_forward.1} parent=5 // pred_fallthru
        _
      %p199 = scmp.lt.s32.totalorder %s11, 2
      // Predicated region
      $region25: #{decoder_forward.1} parent=5 // pred_check
        %p200 = pneg %p199
      $region26: #{decoder_forward.1} parent=5 // pred_check_branch
        %202 = sbr.rel (%p200) target = $region28
      $region27: #{decoder_forward.1} parent=5 // pred_region
        // Predicated region
        $region29: #{decoder_forward.1} parent=27 // pred_check
          %p203 = pneg %p111
        $region30: #{decoder_forward.1} parent=27 // pred_check_branch
          %205 = sbr.rel (%p203) target = $region32
        $region31: #{decoder_forward.1} parent=27 // pred_region
          %s206 = sand.u32 %s101, 1
          %s207 = sand.u32 %s101, 1
          %s208 = smul.addr %s207, 1024
          %s209 = scalar_lea.vmem [#allocation3], %s208
          %s210 = smul.u32 4, %s19
          %s211 = smul.addr %s210, 4
          %s212 = scalar_lea.vmem %s3, %s211
          // Predicated region
          $region33: #{decoder_forward.1} parent=31 // pred_check
            _
          $region34: #{decoder_forward.1} parent=31 // pred_check_branch
            %214 = sbr.rel (0) target = $region36
          $region35: #{decoder_forward.1} parent=31 // pred_region
            // Predicated region
            $region37: #{decoder_forward.1} parent=35 // pred_check
              _
            $region38: #{decoder_forward.1} parent=35 // pred_check_branch
              %216 = sbr.rel (0) target = $region40
            $region39: #{decoder_forward.1} parent=35 // pred_region
              loop: start=0, step=1, limit=1
              $region41: #{decoder_forward.1} parent=39 // loop_pre_header
                _
              $region42: #{decoder_forward.1} parent=39 // loop_header
                %s218 = sphi 0, %s222
                %p219 = scmp.ge.s32.totalorder %s218, 1
                %s223 = sphi %s212, %s212
                %s224 = sphi %s209, %s209
              $region43: #{decoder_forward.1} parent=39 // loop_header_branch
                %221 = sbr.rel (%p219) target = $region47
              $region44: #{decoder_forward.1} parent=39 // loop_body
                %v225 = vld [vmem:[%s223] sm:$0xff]
                %226 = vst [vmem:[%s224] sm:$0xff] %v225
                %v227 = vld [vmem:[%s223 + $0x8] sm:$0xff]
                %228 = vst [vmem:[%s224 + $0x8] sm:$0xff] %v227
                %v229 = vld [vmem:[%s223 + $0x20] sm:$0xff]
                %230 = vst [vmem:[%s224 + $0x10] sm:$0xff] %v229
                %v231 = vld [vmem:[%s223 + $0x28] sm:$0xff]
                %232 = vst [vmem:[%s224 + $0x18] sm:$0xff] %v231
                %v233 = vld [vmem:[%s223 + $0x40] sm:$0xff]
                %234 = vst [vmem:[%s224 + $0x20] sm:$0xff] %v233
                %v235 = vld [vmem:[%s223 + $0x48] sm:$0xff]
                %236 = vst [vmem:[%s224 + $0x28] sm:$0xff] %v235
                %v237 = vld [vmem:[%s223 + $0x60] sm:$0xff]
                %238 = vst [vmem:[%s224 + $0x30] sm:$0xff] %v237
                %v239 = vld [vmem:[%s223 + $0x68] sm:$0xff]
                %240 = vst [vmem:[%s224 + $0x38] sm:$0xff] %v239
                %v241 = vld [vmem:[%s223 + $0x80] sm:$0xff]
                %242 = vst [vmem:[%s224 + $0x40] sm:$0xff] %v241
                %v243 = vld [vmem:[%s223 + $0x88] sm:$0xff]
                %244 = vst [vmem:[%s224 + $0x48] sm:$0xff] %v243
                %v245 = vld [vmem:[%s223 + $0xa0] sm:$0xff]
                %246 = vst [vmem:[%s224 + $0x50] sm:$0xff] %v245
                %v247 = vld [vmem:[%s223 + $0xa8] sm:$0xff]
                %248 = vst [vmem:[%s224 + $0x58] sm:$0xff] %v247
                %v249 = vld [vmem:[%s223 + $0xc0] sm:$0xff]
                %250 = vst [vmem:[%s224 + $0x60] sm:$0xff] %v249
                %v251 = vld [vmem:[%s223 + $0xc8] sm:$0xff]
                %252 = vst [vmem:[%s224 + $0x68] sm:$0xff] %v251
                %v253 = vld [vmem:[%s223 + $0xe0] sm:$0xff]
                %254 = vst [vmem:[%s224 + $0x70] sm:$0xff] %v253
                %v255 = vld [vmem:[%s223 + $0xe8] sm:$0xff]
                %256 = vst [vmem:[%s224 + $0x78] sm:$0xff] %v255
                %v257 = vld [vmem:[%s223 + $0x100] sm:$0xff]
                %258 = vst [vmem:[%s224 + $0x80] sm:$0xff] %v257
                %v259 = vld [vmem:[%s223 + $0x108] sm:$0xff]
                %260 = vst [vmem:[%s224 + $0x88] sm:$0xff] %v259
                %v261 = vld [vmem:[%s223 + $0x120] sm:$0xff]
                %262 = vst [vmem:[%s224 + $0x90] sm:$0xff] %v261
                %v263 = vld [vmem:[%s223 + $0x128] sm:$0xff]
                %264 = vst [vmem:[%s224 + $0x98] sm:$0xff] %v263
                %v265 = vld [vmem:[%s223 + $0x140] sm:$0xff]
                %266 = vst [vmem:[%s224 + $0xa0] sm:$0xff] %v265
                %v267 = vld [vmem:[%s223 + $0x148] sm:$0xff]
                %268 = vst [vmem:[%s224 + $0xa8] sm:$0xff] %v267
                %v269 = vld [vmem:[%s223 + $0x160] sm:$0xff]
                %270 = vst [vmem:[%s224 + $0xb0] sm:$0xff] %v269
                %v271 = vld [vmem:[%s223 + $0x168] sm:$0xff]
                %272 = vst [vmem:[%s224 + $0xb8] sm:$0xff] %v271
                %v273 = vld [vmem:[%s223 + $0x180] sm:$0xff]
                %274 = vst [vmem:[%s224 + $0xc0] sm:$0xff] %v273
                %v275 = vld [vmem:[%s223 + $0x188] sm:$0xff]
                %276 = vst [vmem:[%s224 + $0xc8] sm:$0xff] %v275
                %v277 = vld [vmem:[%s223 + $0x1a0] sm:$0xff]
                %278 = vst [vmem:[%s224 + $0xd0] sm:$0xff] %v277
                %v279 = vld [vmem:[%s223 + $0x1a8] sm:$0xff]
                %280 = vst [vmem:[%s224 + $0xd8] sm:$0xff] %v279
                %v281 = vld [vmem:[%s223 + $0x1c0] sm:$0xff]
                %282 = vst [vmem:[%s224 + $0xe0] sm:$0xff] %v281
                %v283 = vld [vmem:[%s223 + $0x1c8] sm:$0xff]
                %284 = vst [vmem:[%s224 + $0xe8] sm:$0xff] %v283
                %v285 = vld [vmem:[%s223 + $0x1e0] sm:$0xff]
                %286 = vst [vmem:[%s224 + $0xf0] sm:$0xff] %v285
                %v287 = vld [vmem:[%s223 + $0x1e8] sm:$0xff]
                %288 = vst [vmem:[%s224 + $0xf8] sm:$0xff] %v287
                %v289 = vld [vmem:[%s223 + $0x200] sm:$0xff]
                %290 = vst [vmem:[%s224 + $0x100] sm:$0xff] %v289
                %v291 = vld [vmem:[%s223 + $0x208] sm:$0xff]
                %292 = vst [vmem:[%s224 + $0x108] sm:$0xff] %v291
                %v293 = vld [vmem:[%s223 + $0x220] sm:$0xff]
                %294 = vst [vmem:[%s224 + $0x110] sm:$0xff] %v293
                %v295 = vld [vmem:[%s223 + $0x228] sm:$0xff]
                %296 = vst [vmem:[%s224 + $0x118] sm:$0xff] %v295
                %v297 = vld [vmem:[%s223 + $0x240] sm:$0xff]
                %298 = vst [vmem:[%s224 + $0x120] sm:$0xff] %v297
                %v299 = vld [vmem:[%s223 + $0x248] sm:$0xff]
                %300 = vst [vmem:[%s224 + $0x128] sm:$0xff] %v299
                %v301 = vld [vmem:[%s223 + $0x260] sm:$0xff]
                %302 = vst [vmem:[%s224 + $0x130] sm:$0xff] %v301
                %v303 = vld [vmem:[%s223 + $0x268] sm:$0xff]
                %304 = vst [vmem:[%s224 + $0x138] sm:$0xff] %v303
                %v305 = vld [vmem:[%s223 + $0x280] sm:$0xff]
                %306 = vst [vmem:[%s224 + $0x140] sm:$0xff] %v305
                %v307 = vld [vmem:[%s223 + $0x288] sm:$0xff]
                %308 = vst [vmem:[%s224 + $0x148] sm:$0xff] %v307
                %v309 = vld [vmem:[%s223 + $0x2a0] sm:$0xff]
                %310 = vst [vmem:[%s224 + $0x150] sm:$0xff] %v309
                %v311 = vld [vmem:[%s223 + $0x2a8] sm:$0xff]
                %312 = vst [vmem:[%s224 + $0x158] sm:$0xff] %v311
                %v313 = vld [vmem:[%s223 + $0x2c0] sm:$0xff]
                %314 = vst [vmem:[%s224 + $0x160] sm:$0xff] %v313
                %v315 = vld [vmem:[%s223 + $0x2c8] sm:$0xff]
                %316 = vst [vmem:[%s224 + $0x168] sm:$0xff] %v315
                %v317 = vld [vmem:[%s223 + $0x2e0] sm:$0xff]
                %318 = vst [vmem:[%s224 + $0x170] sm:$0xff] %v317
                %v319 = vld [vmem:[%s223 + $0x2e8] sm:$0xff]
                %320 = vst [vmem:[%s224 + $0x178] sm:$0xff] %v319
                %v321 = vld [vmem:[%s223 + $0x300] sm:$0xff]
                %322 = vst [vmem:[%s224 + $0x180] sm:$0xff] %v321
                %v323 = vld [vmem:[%s223 + $0x308] sm:$0xff]
                %324 = vst [vmem:[%s224 + $0x188] sm:$0xff] %v323
                %v325 = vld [vmem:[%s223 + $0x320] sm:$0xff]
                %326 = vst [vmem:[%s224 + $0x190] sm:$0xff] %v325
                %v327 = vld [vmem:[%s223 + $0x328] sm:$0xff]
                %328 = vst [vmem:[%s224 + $0x198] sm:$0xff] %v327
                %v329 = vld [vmem:[%s223 + $0x340] sm:$0xff]
                %330 = vst [vmem:[%s224 + $0x1a0] sm:$0xff] %v329
                %v331 = vld [vmem:[%s223 + $0x348] sm:$0xff]
                %332 = vst [vmem:[%s224 + $0x1a8] sm:$0xff] %v331
                %v333 = vld [vmem:[%s223 + $0x360] sm:$0xff]
                %334 = vst [vmem:[%s224 + $0x1b0] sm:$0xff] %v333
                %v335 = vld [vmem:[%s223 + $0x368] sm:$0xff]
                %336 = vst [vmem:[%s224 + $0x1b8] sm:$0xff] %v335
                %v337 = vld [vmem:[%s223 + $0x380] sm:$0xff]
                %338 = vst [vmem:[%s224 + $0x1c0] sm:$0xff] %v337
                %v339 = vld [vmem:[%s223 + $0x388] sm:$0xff]
                %340 = vst [vmem:[%s224 + $0x1c8] sm:$0xff] %v339
                %v341 = vld [vmem:[%s223 + $0x3a0] sm:$0xff]
                %342 = vst [vmem:[%s224 + $0x1d0] sm:$0xff] %v341
                %v343 = vld [vmem:[%s223 + $0x3a8] sm:$0xff]
                %344 = vst [vmem:[%s224 + $0x1d8] sm:$0xff] %v343
                %v345 = vld [vmem:[%s223 + $0x3c0] sm:$0xff]
                %346 = vst [vmem:[%s224 + $0x1e0] sm:$0xff] %v345
                %v347 = vld [vmem:[%s223 + $0x3c8] sm:$0xff]
                %348 = vst [vmem:[%s224 + $0x1e8] sm:$0xff] %v347
                %v349 = vld [vmem:[%s223 + $0x3e0] sm:$0xff]
                %350 = vst [vmem:[%s224 + $0x1f0] sm:$0xff] %v349
                %v351 = vld [vmem:[%s223 + $0x3e8] sm:$0xff]
                %352 = vst [vmem:[%s224 + $0x1f8] sm:$0xff] %v351
                %v353 = vld [vmem:[%s223 + $0x400] sm:$0xff]
                %354 = vst [vmem:[%s224 + $0x200] sm:$0xff] %v353
                %v355 = vld [vmem:[%s223 + $0x408] sm:$0xff]
                %356 = vst [vmem:[%s224 + $0x208] sm:$0xff] %v355
                %v357 = vld [vmem:[%s223 + $0x420] sm:$0xff]
                %358 = vst [vmem:[%s224 + $0x210] sm:$0xff] %v357
                %v359 = vld [vmem:[%s223 + $0x428] sm:$0xff]
                %360 = vst [vmem:[%s224 + $0x218] sm:$0xff] %v359
                %v361 = vld [vmem:[%s223 + $0x440] sm:$0xff]
                %362 = vst [vmem:[%s224 + $0x220] sm:$0xff] %v361
                %v363 = vld [vmem:[%s223 + $0x448] sm:$0xff]
                %364 = vst [vmem:[%s224 + $0x228] sm:$0xff] %v363
                %v365 = vld [vmem:[%s223 + $0x460] sm:$0xff]
                %366 = vst [vmem:[%s224 + $0x230] sm:$0xff] %v365
                %v367 = vld [vmem:[%s223 + $0x468] sm:$0xff]
                %368 = vst [vmem:[%s224 + $0x238] sm:$0xff] %v367
                %v369 = vld [vmem:[%s223 + $0x480] sm:$0xff]
                %370 = vst [vmem:[%s224 + $0x240] sm:$0xff] %v369
                %v371 = vld [vmem:[%s223 + $0x488] sm:$0xff]
                %372 = vst [vmem:[%s224 + $0x248] sm:$0xff] %v371
                %v373 = vld [vmem:[%s223 + $0x4a0] sm:$0xff]
                %374 = vst [vmem:[%s224 + $0x250] sm:$0xff] %v373
                %v375 = vld [vmem:[%s223 + $0x4a8] sm:$0xff]
                %376 = vst [vmem:[%s224 + $0x258] sm:$0xff] %v375
                %v377 = vld [vmem:[%s223 + $0x4c0] sm:$0xff]
                %378 = vst [vmem:[%s224 + $0x260] sm:$0xff] %v377
                %v379 = vld [vmem:[%s223 + $0x4c8] sm:$0xff]
                %380 = vst [vmem:[%s224 + $0x268] sm:$0xff] %v379
                %v381 = vld [vmem:[%s223 + $0x4e0] sm:$0xff]
                %382 = vst [vmem:[%s224 + $0x270] sm:$0xff] %v381
                %v383 = vld [vmem:[%s223 + $0x4e8] sm:$0xff]
                %384 = vst [vmem:[%s224 + $0x278] sm:$0xff] %v383
                %v385 = vld [vmem:[%s223 + $0x500] sm:$0xff]
                %386 = vst [vmem:[%s224 + $0x280] sm:$0xff] %v385
                %v387 = vld [vmem:[%s223 + $0x508] sm:$0xff]
                %388 = vst [vmem:[%s224 + $0x288] sm:$0xff] %v387
                %v389 = vld [vmem:[%s223 + $0x520] sm:$0xff]
                %390 = vst [vmem:[%s224 + $0x290] sm:$0xff] %v389
                %v391 = vld [vmem:[%s223 + $0x528] sm:$0xff]
                %392 = vst [vmem:[%s224 + $0x298] sm:$0xff] %v391
                %v393 = vld [vmem:[%s223 + $0x540] sm:$0xff]
                %394 = vst [vmem:[%s224 + $0x2a0] sm:$0xff] %v393
                %v395 = vld [vmem:[%s223 + $0x548] sm:$0xff]
                %396 = vst [vmem:[%s224 + $0x2a8] sm:$0xff] %v395
                %v397 = vld [vmem:[%s223 + $0x560] sm:$0xff]
                %398 = vst [vmem:[%s224 + $0x2b0] sm:$0xff] %v397
                %v399 = vld [vmem:[%s223 + $0x568] sm:$0xff]
                %400 = vst [vmem:[%s224 + $0x2b8] sm:$0xff] %v399
                %v401 = vld [vmem:[%s223 + $0x580] sm:$0xff]
                %402 = vst [vmem:[%s224 + $0x2c0] sm:$0xff] %v401
                %v403 = vld [vmem:[%s223 + $0x588] sm:$0xff]
                %404 = vst [vmem:[%s224 + $0x2c8] sm:$0xff] %v403
                %v405 = vld [vmem:[%s223 + $0x5a0] sm:$0xff]
                %406 = vst [vmem:[%s224 + $0x2d0] sm:$0xff] %v405
                %v407 = vld [vmem:[%s223 + $0x5a8] sm:$0xff]
                %408 = vst [vmem:[%s224 + $0x2d8] sm:$0xff] %v407
                %v409 = vld [vmem:[%s223 + $0x5c0] sm:$0xff]
                %410 = vst [vmem:[%s224 + $0x2e0] sm:$0xff] %v409
                %v411 = vld [vmem:[%s223 + $0x5c8] sm:$0xff]
                %412 = vst [vmem:[%s224 + $0x2e8] sm:$0xff] %v411
                %v413 = vld [vmem:[%s223 + $0x5e0] sm:$0xff]
                %414 = vst [vmem:[%s224 + $0x2f0] sm:$0xff] %v413
                %v415 = vld [vmem:[%s223 + $0x5e8] sm:$0xff]
                %416 = vst [vmem:[%s224 + $0x2f8] sm:$0xff] %v415
                %v417 = vld [vmem:[%s223 + $0x600] sm:$0xff]
                %418 = vst [vmem:[%s224 + $0x300] sm:$0xff] %v417
                %v419 = vld [vmem:[%s223 + $0x608] sm:$0xff]
                %420 = vst [vmem:[%s224 + $0x308] sm:$0xff] %v419
                %v421 = vld [vmem:[%s223 + $0x620] sm:$0xff]
                %422 = vst [vmem:[%s224 + $0x310] sm:$0xff] %v421
                %v423 = vld [vmem:[%s223 + $0x628] sm:$0xff]
                %424 = vst [vmem:[%s224 + $0x318] sm:$0xff] %v423
                %v425 = vld [vmem:[%s223 + $0x640] sm:$0xff]
                %426 = vst [vmem:[%s224 + $0x320] sm:$0xff] %v425
                %v427 = vld [vmem:[%s223 + $0x648] sm:$0xff]
                %428 = vst [vmem:[%s224 + $0x328] sm:$0xff] %v427
                %v429 = vld [vmem:[%s223 + $0x660] sm:$0xff]
                %430 = vst [vmem:[%s224 + $0x330] sm:$0xff] %v429
                %v431 = vld [vmem:[%s223 + $0x668] sm:$0xff]
                %432 = vst [vmem:[%s224 + $0x338] sm:$0xff] %v431
                %v433 = vld [vmem:[%s223 + $0x680] sm:$0xff]
                %434 = vst [vmem:[%s224 + $0x340] sm:$0xff] %v433
                %v435 = vld [vmem:[%s223 + $0x688] sm:$0xff]
                %436 = vst [vmem:[%s224 + $0x348] sm:$0xff] %v435
                %v437 = vld [vmem:[%s223 + $0x6a0] sm:$0xff]
                %438 = vst [vmem:[%s224 + $0x350] sm:$0xff] %v437
                %v439 = vld [vmem:[%s223 + $0x6a8] sm:$0xff]
                %440 = vst [vmem:[%s224 + $0x358] sm:$0xff] %v439
                %v441 = vld [vmem:[%s223 + $0x6c0] sm:$0xff]
                %442 = vst [vmem:[%s224 + $0x360] sm:$0xff] %v441
                %v443 = vld [vmem:[%s223 + $0x6c8] sm:$0xff]
                %444 = vst [vmem:[%s224 + $0x368] sm:$0xff] %v443
                %v445 = vld [vmem:[%s223 + $0x6e0] sm:$0xff]
                %446 = vst [vmem:[%s224 + $0x370] sm:$0xff] %v445
                %v447 = vld [vmem:[%s223 + $0x6e8] sm:$0xff]
                %448 = vst [vmem:[%s224 + $0x378] sm:$0xff] %v447
                %v449 = vld [vmem:[%s223 + $0x700] sm:$0xff]
                %450 = vst [vmem:[%s224 + $0x380] sm:$0xff] %v449
                %v451 = vld [vmem:[%s223 + $0x708] sm:$0xff]
                %452 = vst [vmem:[%s224 + $0x388] sm:$0xff] %v451
                %v453 = vld [vmem:[%s223 + $0x720] sm:$0xff]
                %454 = vst [vmem:[%s224 + $0x390] sm:$0xff] %v453
                %v455 = vld [vmem:[%s223 + $0x728] sm:$0xff]
                %456 = vst [vmem:[%s224 + $0x398] sm:$0xff] %v455
                %v457 = vld [vmem:[%s223 + $0x740] sm:$0xff]
                %458 = vst [vmem:[%s224 + $0x3a0] sm:$0xff] %v457
                %v459 = vld [vmem:[%s223 + $0x748] sm:$0xff]
                %460 = vst [vmem:[%s224 + $0x3a8] sm:$0xff] %v459
                %v461 = vld [vmem:[%s223 + $0x760] sm:$0xff]
                %462 = vst [vmem:[%s224 + $0x3b0] sm:$0xff] %v461
                %v463 = vld [vmem:[%s223 + $0x768] sm:$0xff]
                %464 = vst [vmem:[%s224 + $0x3b8] sm:$0xff] %v463
                %v465 = vld [vmem:[%s223 + $0x780] sm:$0xff]
                %466 = vst [vmem:[%s224 + $0x3c0] sm:$0xff] %v465
                %v467 = vld [vmem:[%s223 + $0x788] sm:$0xff]
                %468 = vst [vmem:[%s224 + $0x3c8] sm:$0xff] %v467
                %v469 = vld [vmem:[%s223 + $0x7a0] sm:$0xff]
                %470 = vst [vmem:[%s224 + $0x3d0] sm:$0xff] %v469
                %v471 = vld [vmem:[%s223 + $0x7a8] sm:$0xff]
                %472 = vst [vmem:[%s224 + $0x3d8] sm:$0xff] %v471
                %v473 = vld [vmem:[%s223 + $0x7c0] sm:$0xff]
                %474 = vst [vmem:[%s224 + $0x3e0] sm:$0xff] %v473
                %v475 = vld [vmem:[%s223 + $0x7c8] sm:$0xff]
                %476 = vst [vmem:[%s224 + $0x3e8] sm:$0xff] %v475
                %v477 = vld [vmem:[%s223 + $0x7e0] sm:$0xff]
                %478 = vst [vmem:[%s224 + $0x3f0] sm:$0xff] %v477
                %v479 = vld [vmem:[%s223 + $0x7e8] sm:$0xff]
                %480 = vst [vmem:[%s224 + $0x3f8] sm:$0xff] %v479
              $region45: #{decoder_forward.1} parent=39 // loop_footer
                %s222 = sadd.s32 1, %s218
              $region46: #{decoder_forward.1} parent=39 // loop_footer_branch
                %217 = sbr.rel target = $region42
              $region47: #{decoder_forward.1} parent=39 // loop_exit
                _
            $region40: #{decoder_forward.1} parent=35 // pred_fallthru
              _
            // Predicated region
            $region48: #{decoder_forward.1} parent=35 // pred_check
              _
            $region49: #{decoder_forward.1} parent=35 // pred_check_branch
              %482 = sbr.rel target = $region51
            $region50: #{decoder_forward.1} parent=35 // pred_region
              _
            $region51: #{decoder_forward.1} parent=35 // pred_fallthru
              _
          $region36: #{decoder_forward.1} parent=31 // pred_fallthru
            _
          %483 = vnop
        $region32: #{decoder_forward.1} parent=27 // pred_fallthru
          _
        // Predicated region
        $region52: #{decoder_forward.1} parent=27 // pred_check
          %p484 = pneg %p137
        $region53: #{decoder_forward.1} parent=27 // pred_check_branch
          %486 = sbr.rel (%p484) target = $region55
        $region54: #{decoder_forward.1} parent=27 // pred_region
          %s487 = smul.u32 4, %s19
          %p488 = scmp.lt.s32.totalorder %s487, 7
          %s489 = scalar_select %p488, %s487, 7
          %s490 = scalar_lea.vmem %s4, %s489
          %s491 = smul.u32 4, %s19
        $region55: #{decoder_forward.1} parent=27 // pred_fallthru
          _
      $region28: #{decoder_forward.1} parent=5 // pred_fallthru
        _
      %p492 = scmp.le.s32.totalorder 1, %s11
      %p493 = scmp.lt.s32.totalorder %s11, 3
      %p494 = pnand %p492, %p493
      %p495 = pneg %p494
      // Predicated region
      $region56: #{decoder_forward.1} parent=5 // pred_check
        _
      $region57: #{decoder_forward.1} parent=5 // pred_check_branch
        %497 = sbr.rel (%p494) target = $region59
      $region58: #{decoder_forward.1} parent=5 // pred_region
        %s498 = ssub.s32 %s11, 1
        %s499 = sand.u32 %s104, 1
        %s500 = sand.u32 %s104, 1
        %s501 = smul.addr %s500, 1024
        %s502 = scalar_lea.vmem [#allocation3], %s501
        // Predicated region
        $region60: #{decoder_forward.1} parent=58 // pred_check
          %p503 = pneg %p117
        $region61: #{decoder_forward.1} parent=58 // pred_check_branch
          %505 = sbr.rel (%p503) target = $region63
        $region62: #{decoder_forward.1} parent=58 // pred_region
          _
        $region63: #{decoder_forward.1} parent=58 // pred_fallthru
          _
        %p506 = scmp.lt.s32.totalorder %s20, 0
        %s507 = scalar_select %p506, %s20, 0
        %s508 = smul.addr %s507, 4
        %s509 = scalar_lea.vmem %s0, %s508
        %p510 = pneg %p49
        %p511 = pneg %p46
        %p512 = pneg %p70
        %p513 = pneg %p67
        %p514 = pneg %p91
        %p515 = pneg %p88
        %s516 = sand.u32 %s104, 1
        %s517 = sand.u32 %s104, 1
        %s518 = smul.addr %s517, 1024
        %s519 = scalar_lea.vmem [#allocation3], %s518
        %p520 = pneg %p117
        %p521 = pneg %p114
        %s522 = smul.u32 4, %s21
        %p523 = scmp.lt.s32.totalorder %s522, 7
        %s524 = scalar_select %p523, %s522, 7
        %s525 = scalar_lea.vmem %s4, %s524
        %p526 = pneg %p143
        %p527 = pneg %p140
        %p528 = pneg %p171
        %p529 = pneg %p168
        %s530 = smul.u32 4, %s21
        %p531 = scmp.lt.s32.totalorder %s20, 0
        %s532 = scalar_select %p531, %s20, 0
        %p533 = scmp.lt.s32.totalorder %s530, 7
        %s534 = scalar_select %p533, %s530, 7
        %s535 = smul.addr %s532, 8
        %s536 = sadd.s32 %s534, %s535
        %s537 = smul.addr %s536, 8
        %s538 = scalar_lea.vmem %s5, %s537
        %p539 = scmp.lt.s32.totalorder %s20, 0
        %s540 = scalar_select %p539, %s20, 0
        %s541 = smul.addr %s540, 4
        %s542 = scalar_lea.vmem %s0, %s541
        %s543 = smul.u32 4, %s21
        %s544 = smul.u32 4, %s21
        %p545 = scmp.lt.s32.totalorder %s544, 7
        %s546 = scalar_select %p545, %s544, 7
        %s547 = scalar_lea.vmem %s4, %s546
        %s548 = smul.u32 4, %s21
        %s549 = smul.u32 4, %s21
        %p550 = scmp.lt.s32.totalorder %s20, 0
        %s551 = scalar_select %p550, %s20, 0
        %p552 = scmp.lt.s32.totalorder %s549, 7
        %s553 = scalar_select %p552, %s549, 7
        %s554 = smul.addr %s551, 8
        %s555 = sadd.s32 %s553, %s554
        %s556 = smul.addr %s555, 8
        %s557 = scalar_lea.vmem %s5, %s556
        %s558 = smul.u32 4, %s21
        %p560 = scmp.eq.s32.totalorder %s21, 0
        // Predicated region
        $region64: #{decoder_forward.1} parent=58 // pred_check
          %p561 = pneg %p560
        $region65: #{decoder_forward.1} parent=58 // pred_check_branch
          %563 = sbr.rel (%p561) target = $region67
        $region66: #{decoder_forward.1} parent=58 // pred_region
          %v564 = vld [vmem:[%s542] sm:$0xf]
          %v565 = vld [vmem:[%s1] sm:$0xff]
          %v566 = vld [vmem:[%s1 + $0x8] sm:$0xff]
          %v567 = vld [vmem:[%s1 + $0x10] sm:$0xff]
          %v568 = vld [vmem:[%s1 + $0x18] sm:$0xff]
          %v569 = vld [vmem:[%s1 + $0x20] sm:$0xff]
          %v570 = vld [vmem:[%s1 + $0x28] sm:$0xff]
          %v571 = vld [vmem:[%s1 + $0x30] sm:$0xff]
          %v572 = vld [vmem:[%s1 + $0x38] sm:$0xff]
          %v573 = vld [vmem:[%s2] sm:$0xf]
          %v575 = vlaneseq
          %v576 = vshrl.u32 %v575, 7
          %v577 = vsub.s32 0, %v576
          %v578 = vrot.slane %v573, %v577
          %v579 = vlaneseq
          %v580 = vshrl.u32 %v579, 7
          %v581 = vsub.s32 1, %v580
          %v582 = vrot.slane %v573, %v581
          %v583 = vlaneseq
          %v584 = vshrl.u32 %v583, 7
          %v585 = vsub.s32 2, %v584
          %v586 = vrot.slane %v573, %v585
          %v587 = vlaneseq
          %v588 = vshrl.u32 %v587, 7
          %v589 = vsub.s32 3, %v588
          %v590 = vrot.slane %v573, %v589
          %v603 = vunpack.c.l.b16 %v565
          %v604 = vunpack.c.h.b16 %v565
          %v605 = vunpack.c.l.b16 %v566
          %v606 = vunpack.c.h.b16 %v566
          %v607 = vunpack.c.l.b16 %v567
          %v608 = vunpack.c.h.b16 %v567
          %v609 = vunpack.c.l.b16 %v568
          %v610 = vunpack.c.h.b16 %v568
          %v611 = vunpack.c.l.b16 %v569
          %v612 = vunpack.c.h.b16 %v569
          %v613 = vunpack.c.l.b16 %v570
          %v614 = vunpack.c.h.b16 %v570
          %v615 = vunpack.c.l.b16 %v571
          %v616 = vunpack.c.h.b16 %v571
          %v617 = vunpack.c.l.b16 %v572
          %v618 = vunpack.c.h.b16 %v572
          %v619 = vpack.c.b16 %v607, %v603
          %v620 = vpack.c.b16 %v608, %v604
          %v621 = vpack.c.b16 %v609, %v605
          %v622 = vpack.c.b16 %v610, %v606
          %v623 = vpack.c.b16 %v615, %v611
          %v624 = vpack.c.b16 %v616, %v612
          %v625 = vpack.c.b16 %v617, %v613
          %v626 = vpack.c.b16 %v618, %v614
          %vm635 = vcmask 261120
          %v637 = vsel %vm635, %v564, 0
          %639 = vmatprep.subr.bf16.mxu0 %v620
          %640 = vmatpush1.bf16.msra.mxu0 %v619
          %641 = vmatprep.subr.bf16.mxu0 %v624
          %642 = vmatpush1.bf16.msra.mxu0 %v623
          %643 = vmatprep.subr.bf16.mxu0 0
          %644 = vmatpush1.bf16.msra.mxu0 0
          %645 = vmatprep.subr.bf16.mxu0 0
          %646 = vmatpush1.bf16.msra.mxu0 0
          %647 = vmatprep.subr.bf16.mxu0 0
          %648 = vmatpush1.bf16.msra.mxu0 0
          %649 = vmatprep.subr.bf16.mxu0 0
          %650 = vmatpush1.bf16.msra.mxu0 0
          %651 = vmatprep.subr.bf16.mxu0 0
          %652 = vmatpush1.bf16.msra.mxu0 0
          %653 = vmatprep.subr.bf16.mxu0 0
          %654 = vmatpush1.bf16.msra.mxu0 0
          %655 = vmatprep.subr.bf16.mxu0 0
          %656 = vmatpush1.bf16.msra.mxu0 0
          %657 = vmatprep.subr.bf16.mxu0 0
          %658 = vmatpush1.bf16.msra.mxu0 0
          %659 = vmatprep.subr.bf16.mxu0 0
          %660 = vmatpush1.bf16.msra.mxu0 0
          %661 = vmatprep.subr.bf16.mxu0 0
          %662 = vmatpush1.bf16.msra.mxu0 0
          %663 = vmatprep.subr.bf16.mxu0 0
          %664 = vmatpush1.bf16.msra.mxu0 0
          %665 = vmatprep.subr.bf16.mxu0 0
          %666 = vmatpush1.bf16.msra.mxu0 0
          %667 = vmatprep.subr.bf16.mxu0 0
          %668 = vmatpush1.bf16.msra.mxu0 0
          %669 = vmatprep.subr.bf16.mxu0 0
          %670 = vmatpush1.bf16.msra.mxu0 0
          %671 = vmatprep.mubr.bf16.mxu0 0
          %672 = vmatmul.mubr.bf16.gmra.mrb[0].mxu0 %v637
          %v673 = vpop.f32.mrb[0].mxu0
          %v674 = vadd.f32 %v578, %v673
          %v675 = vpop.f32.mrb[0].mxu0
          %v676 = vadd.f32 %v582, %v675
          %v677 = vpop.f32.mrb[0].mxu0
          %v678 = vpop.f32.mrb[0].mxu0
          %679 = vdwg.mxu0
          %680 = vmatprep.subr.bf16.mxu0 %v622
          %681 = vmatpush1.bf16.msra.mxu0 %v621
          %682 = vmatprep.subr.bf16.mxu0 %v626
          %683 = vmatpush1.bf16.msra.mxu0 %v625
          %684 = vmatprep.subr.bf16.mxu0 0
          %685 = vmatpush1.bf16.msra.mxu0 0
          %686 = vmatprep.subr.bf16.mxu0 0
          %687 = vmatpush1.bf16.msra.mxu0 0
          %688 = vmatprep.subr.bf16.mxu0 0
          %689 = vmatpush1.bf16.msra.mxu0 0
          %690 = vmatprep.subr.bf16.mxu0 0
          %691 = vmatpush1.bf16.msra.mxu0 0
          %692 = vmatprep.subr.bf16.mxu0 0
          %693 = vmatpush1.bf16.msra.mxu0 0
          %694 = vmatprep.subr.bf16.mxu0 0
          %695 = vmatpush1.bf16.msra.mxu0 0
          %696 = vmatprep.subr.bf16.mxu0 0
          %697 = vmatpush1.bf16.msra.mxu0 0
          %698 = vmatprep.subr.bf16.mxu0 0
          %699 = vmatpush1.bf16.msra.mxu0 0
          %700 = vmatprep.subr.bf16.mxu0 0
          %701 = vmatpush1.bf16.msra.mxu0 0
          %702 = vmatprep.subr.bf16.mxu0 0
          %703 = vmatpush1.bf16.msra.mxu0 0
          %704 = vmatprep.subr.bf16.mxu0 0
          %705 = vmatpush1.bf16.msra.mxu0 0
          %706 = vmatprep.subr.bf16.mxu0 0
          %707 = vmatpush1.bf16.msra.mxu0 0
          %708 = vmatprep.subr.bf16.mxu0 0
          %709 = vmatpush1.bf16.msra.mxu0 0
          %710 = vmatprep.subr.bf16.mxu0 0
          %711 = vmatpush1.bf16.msra.mxu0 0
          %712 = vmatprep.mubr.bf16.mxu0 0
          %713 = vmatmul.mubr.bf16.gmra.mrb[0].mxu0 %v637
          %v714 = vpop.f32.mrb[0].mxu0
          %v715 = vadd.f32 %v586, %v714
          %v716 = vpop.f32.mrb[0].mxu0
          %v717 = vadd.f32 %v590, %v716
          %v718 = vpop.f32.mrb[0].mxu0
          %v719 = vpop.f32.mrb[0].mxu0
          %720 = vdwg.mxu0
          %v721 = vmax.f32 %v674, 0.0
          %v722 = vmax.f32 %v676, 0.0
          %v723 = vmax.f32 %v715, 0.0
          %v724 = vmax.f32 %v717, 0.0
          %v725 = vpack.c.bf16 %v721, %v721
          %v726 = vpack.c.bf16 %v722, %v722
          %v727 = vpack.c.bf16 %v723, %v723
          %v728 = vpack.c.bf16 %v724, %v724
          %v733 = vunpack.c.l.b16 %v725
          %v734 = vunpack.c.l.b16 %v726
          %v735 = vunpack.c.l.b16 %v727
          %v736 = vunpack.c.l.b16 %v728
          %v737 = vpack.c.b16 %v734, %v733
          %v738 = vpack.c.b16 %v736, %v735
          %741 = vst [vmem:[#allocation2] sm:$0xff] %v737
          %742 = vst [vmem:[#allocation2 + $0x8] sm:$0xff] %v738
        $region67: #{decoder_forward.1} parent=58 // pred_fallthru
          _
        %v743 = vld [vmem:[#allocation2] sm:$0xff]
        %v744 = vld [vmem:[#allocation2 + $0x8] sm:$0xff]
        %v745 = vld [vmem:[%s502] sm:$0xff]
        %v746 = vld [vmem:[%s502 + $0x8] sm:$0xff]
        %v747 = vld [vmem:[%s502 + $0x10] sm:$0xff]
        %v748 = vld [vmem:[%s502 + $0x18] sm:$0xff]
        %v749 = vld [vmem:[%s502 + $0x20] sm:$0xff]
        %v750 = vld [vmem:[%s502 + $0x28] sm:$0xff]
        %v751 = vld [vmem:[%s502 + $0x30] sm:$0xff]
        %v752 = vld [vmem:[%s502 + $0x38] sm:$0xff]
        %v753 = vld [vmem:[%s502 + $0x40] sm:$0xff]
        %v754 = vld [vmem:[%s502 + $0x48] sm:$0xff]
        %v755 = vld [vmem:[%s502 + $0x50] sm:$0xff]
        %v756 = vld [vmem:[%s502 + $0x58] sm:$0xff]
        %v757 = vld [vmem:[%s502 + $0x60] sm:$0xff]
        %v758 = vld [vmem:[%s502 + $0x68] sm:$0xff]
        %v759 = vld [vmem:[%s502 + $0x70] sm:$0xff]
        %v760 = vld [vmem:[%s502 + $0x78] sm:$0xff]
        %v761 = vld [vmem:[%s502 + $0x80] sm:$0xff]
        %v762 = vld [vmem:[%s502 + $0x88] sm:$0xff]
        %v763 = vld [vmem:[%s502 + $0x90] sm:$0xff]
        %v764 = vld [vmem:[%s502 + $0x98] sm:$0xff]
        %v765 = vld [vmem:[%s502 + $0xa0] sm:$0xff]
        %v766 = vld [vmem:[%s502 + $0xa8] sm:$0xff]
        %v767 = vld [vmem:[%s502 + $0xb0] sm:$0xff]
        %v768 = vld [vmem:[%s502 + $0xb8] sm:$0xff]
        %v769 = vld [vmem:[%s502 + $0xc0] sm:$0xff]
        %v770 = vld [vmem:[%s502 + $0xc8] sm:$0xff]
        %v771 = vld [vmem:[%s502 + $0xd0] sm:$0xff]
        %v772 = vld [vmem:[%s502 + $0xd8] sm:$0xff]
        %v773 = vld [vmem:[%s502 + $0xe0] sm:$0xff]
        %v774 = vld [vmem:[%s502 + $0xe8] sm:$0xff]
        %v775 = vld [vmem:[%s502 + $0xf0] sm:$0xff]
        %v776 = vld [vmem:[%s502 + $0xf8] sm:$0xff]
        %v777 = vld [vmem:[%s502 + $0x100] sm:$0xff]
        %v778 = vld [vmem:[%s502 + $0x108] sm:$0xff]
        %v779 = vld [vmem:[%s502 + $0x110] sm:$0xff]
        %v780 = vld [vmem:[%s502 + $0x118] sm:$0xff]
        %v781 = vld [vmem:[%s502 + $0x120] sm:$0xff]
        %v782 = vld [vmem:[%s502 + $0x128] sm:$0xff]
        %v783 = vld [vmem:[%s502 + $0x130] sm:$0xff]
        %v784 = vld [vmem:[%s502 + $0x138] sm:$0xff]
        %v785 = vld [vmem:[%s502 + $0x140] sm:$0xff]
        %v786 = vld [vmem:[%s502 + $0x148] sm:$0xff]
        %v787 = vld [vmem:[%s502 + $0x150] sm:$0xff]
        %v788 = vld [vmem:[%s502 + $0x158] sm:$0xff]
        %v789 = vld [vmem:[%s502 + $0x160] sm:$0xff]
        %v790 = vld [vmem:[%s502 + $0x168] sm:$0xff]
        %v791 = vld [vmem:[%s502 + $0x170] sm:$0xff]
        %v792 = vld [vmem:[%s502 + $0x178] sm:$0xff]
        %v793 = vld [vmem:[%s502 + $0x180] sm:$0xff]
        %v794 = vld [vmem:[%s502 + $0x188] sm:$0xff]
        %v795 = vld [vmem:[%s502 + $0x190] sm:$0xff]
        %v796 = vld [vmem:[%s502 + $0x198] sm:$0xff]
        %v797 = vld [vmem:[%s502 + $0x1a0] sm:$0xff]
        %v798 = vld [vmem:[%s502 + $0x1a8] sm:$0xff]
        %v799 = vld [vmem:[%s502 + $0x1b0] sm:$0xff]
        %v800 = vld [vmem:[%s502 + $0x1b8] sm:$0xff]
        %v801 = vld [vmem:[%s502 + $0x1c0] sm:$0xff]
        %v802 = vld [vmem:[%s502 + $0x1c8] sm:$0xff]
        %v803 = vld [vmem:[%s502 + $0x1d0] sm:$0xff]
        %v804 = vld [vmem:[%s502 + $0x1d8] sm:$0xff]
        %v805 = vld [vmem:[%s502 + $0x1e0] sm:$0xff]
        %v806 = vld [vmem:[%s502 + $0x1e8] sm:$0xff]
        %v807 = vld [vmem:[%s502 + $0x1f0] sm:$0xff]
        %v808 = vld [vmem:[%s502 + $0x1f8] sm:$0xff]
        %v809 = vld [vmem:[%s502 + $0x200] sm:$0xff]
        %v810 = vld [vmem:[%s502 + $0x208] sm:$0xff]
        %v811 = vld [vmem:[%s502 + $0x210] sm:$0xff]
        %v812 = vld [vmem:[%s502 + $0x218] sm:$0xff]
        %v813 = vld [vmem:[%s502 + $0x220] sm:$0xff]
        %v814 = vld [vmem:[%s502 + $0x228] sm:$0xff]
        %v815 = vld [vmem:[%s502 + $0x230] sm:$0xff]
        %v816 = vld [vmem:[%s502 + $0x238] sm:$0xff]
        %v817 = vld [vmem:[%s502 + $0x240] sm:$0xff]
        %v818 = vld [vmem:[%s502 + $0x248] sm:$0xff]
        %v819 = vld [vmem:[%s502 + $0x250] sm:$0xff]
        %v820 = vld [vmem:[%s502 + $0x258] sm:$0xff]
        %v821 = vld [vmem:[%s502 + $0x260] sm:$0xff]
        %v822 = vld [vmem:[%s502 + $0x268] sm:$0xff]
        %v823 = vld [vmem:[%s502 + $0x270] sm:$0xff]
        %v824 = vld [vmem:[%s502 + $0x278] sm:$0xff]
        %v825 = vld [vmem:[%s502 + $0x280] sm:$0xff]
        %v826 = vld [vmem:[%s502 + $0x288] sm:$0xff]
        %v827 = vld [vmem:[%s502 + $0x290] sm:$0xff]
        %v828 = vld [vmem:[%s502 + $0x298] sm:$0xff]
        %v829 = vld [vmem:[%s502 + $0x2a0] sm:$0xff]
        %v830 = vld [vmem:[%s502 + $0x2a8] sm:$0xff]
        %v831 = vld [vmem:[%s502 + $0x2b0] sm:$0xff]
        %v832 = vld [vmem:[%s502 + $0x2b8] sm:$0xff]
        %v833 = vld [vmem:[%s502 + $0x2c0] sm:$0xff]
        %v834 = vld [vmem:[%s502 + $0x2c8] sm:$0xff]
        %v835 = vld [vmem:[%s502 + $0x2d0] sm:$0xff]
        %v836 = vld [vmem:[%s502 + $0x2d8] sm:$0xff]
        %v837 = vld [vmem:[%s502 + $0x2e0] sm:$0xff]
        %v838 = vld [vmem:[%s502 + $0x2e8] sm:$0xff]
        %v839 = vld [vmem:[%s502 + $0x2f0] sm:$0xff]
        %v840 = vld [vmem:[%s502 + $0x2f8] sm:$0xff]
        %v841 = vld [vmem:[%s502 + $0x300] sm:$0xff]
        %v842 = vld [vmem:[%s502 + $0x308] sm:$0xff]
        %v843 = vld [vmem:[%s502 + $0x310] sm:$0xff]
        %v844 = vld [vmem:[%s502 + $0x318] sm:$0xff]
        %v845 = vld [vmem:[%s502 + $0x320] sm:$0xff]
        %v846 = vld [vmem:[%s502 + $0x328] sm:$0xff]
        %v847 = vld [vmem:[%s502 + $0x330] sm:$0xff]
        %v848 = vld [vmem:[%s502 + $0x338] sm:$0xff]
        %v849 = vld [vmem:[%s502 + $0x340] sm:$0xff]
        %v850 = vld [vmem:[%s502 + $0x348] sm:$0xff]
        %v851 = vld [vmem:[%s502 + $0x350] sm:$0xff]
        %v852 = vld [vmem:[%s502 + $0x358] sm:$0xff]
        %v853 = vld [vmem:[%s502 + $0x360] sm:$0xff]
        %v854 = vld [vmem:[%s502 + $0x368] sm:$0xff]
        %v855 = vld [vmem:[%s502 + $0x370] sm:$0xff]
        %v856 = vld [vmem:[%s502 + $0x378] sm:$0xff]
        %v857 = vld [vmem:[%s502 + $0x380] sm:$0xff]
        %v858 = vld [vmem:[%s502 + $0x388] sm:$0xff]
        %v859 = vld [vmem:[%s502 + $0x390] sm:$0xff]
        %v860 = vld [vmem:[%s502 + $0x398] sm:$0xff]
        %v861 = vld [vmem:[%s502 + $0x3a0] sm:$0xff]
        %v862 = vld [vmem:[%s502 + $0x3a8] sm:$0xff]
        %v863 = vld [vmem:[%s502 + $0x3b0] sm:$0xff]
        %v864 = vld [vmem:[%s502 + $0x3b8] sm:$0xff]
        %v865 = vld [vmem:[%s502 + $0x3c0] sm:$0xff]
        %v866 = vld [vmem:[%s502 + $0x3c8] sm:$0xff]
        %v867 = vld [vmem:[%s502 + $0x3d0] sm:$0xff]
        %v868 = vld [vmem:[%s502 + $0x3d8] sm:$0xff]
        %v869 = vld [vmem:[%s502 + $0x3e0] sm:$0xff]
        %v870 = vld [vmem:[%s502 + $0x3e8] sm:$0xff]
        %v871 = vld [vmem:[%s502 + $0x3f0] sm:$0xff]
        %v872 = vld [vmem:[%s502 + $0x3f8] sm:$0xff]
        %v873 = vld [vmem:[%s547] sm:$0xf]
        %v875 = vlaneseq
        %v876 = vshrl.u32 %v875, 7
        %v877 = vsub.s32 0, %v876
        %v878 = vrot.slane %v873, %v877
        %v879 = vlaneseq
        %v880 = vshrl.u32 %v879, 7
        %v881 = vsub.s32 1, %v880
        %v882 = vrot.slane %v873, %v881
        %v883 = vlaneseq
        %v884 = vshrl.u32 %v883, 7
        %v885 = vsub.s32 2, %v884
        %v886 = vrot.slane %v873, %v885
        %v887 = vlaneseq
        %v888 = vshrl.u32 %v887, 7
        %v889 = vsub.s32 3, %v888
        %v890 = vrot.slane %v873, %v889
        %v897 = vunpack.c.l.b16 %v743
        %v898 = vunpack.c.h.b16 %v743
        %v899 = vunpack.c.l.b16 %v744
        %v900 = vunpack.c.h.b16 %v744
        %v901 = vpack.c.b16 %v897, %v897
        %v902 = vpack.c.b16 %v898, %v898
        %v903 = vpack.c.b16 %v899, %v899
        %v904 = vpack.c.b16 %v900, %v900
        %v1037 = vunpack.c.l.b16 %v745
        %v1038 = vunpack.c.h.b16 %v745
        %v1039 = vunpack.c.l.b16 %v746
        %v1040 = vunpack.c.h.b16 %v746
        %v1041 = vunpack.c.l.b16 %v747
        %v1042 = vunpack.c.h.b16 %v747
        %v1043 = vunpack.c.l.b16 %v748
        %v1044 = vunpack.c.h.b16 %v748
        %v1045 = vunpack.c.l.b16 %v749
        %v1046 = vunpack.c.h.b16 %v749
        %v1047 = vunpack.c.l.b16 %v750
        %v1048 = vunpack.c.h.b16 %v750
        %v1049 = vunpack.c.l.b16 %v751
        %v1050 = vunpack.c.h.b16 %v751
        %v1051 = vunpack.c.l.b16 %v752
        %v1052 = vunpack.c.h.b16 %v752
        %v1053 = vunpack.c.l.b16 %v753
        %v1054 = vunpack.c.h.b16 %v753
        %v1055 = vunpack.c.l.b16 %v754
        %v1056 = vunpack.c.h.b16 %v754
        %v1057 = vunpack.c.l.b16 %v755
        %v1058 = vunpack.c.h.b16 %v755
        %v1059 = vunpack.c.l.b16 %v756
        %v1060 = vunpack.c.h.b16 %v756
        %v1061 = vunpack.c.l.b16 %v757
        %v1062 = vunpack.c.h.b16 %v757
        %v1063 = vunpack.c.l.b16 %v758
        %v1064 = vunpack.c.h.b16 %v758
        %v1065 = vunpack.c.l.b16 %v759
        %v1066 = vunpack.c.h.b16 %v759
        %v1067 = vunpack.c.l.b16 %v760
        %v1068 = vunpack.c.h.b16 %v760
        %v1069 = vunpack.c.l.b16 %v761
        %v1070 = vunpack.c.h.b16 %v761
        %v1071 = vunpack.c.l.b16 %v762
        %v1072 = vunpack.c.h.b16 %v762
        %v1073 = vunpack.c.l.b16 %v763
        %v1074 = vunpack.c.h.b16 %v763
        %v1075 = vunpack.c.l.b16 %v764
        %v1076 = vunpack.c.h.b16 %v764
        %v1077 = vunpack.c.l.b16 %v765
        %v1078 = vunpack.c.h.b16 %v765
        %v1079 = vunpack.c.l.b16 %v766
        %v1080 = vunpack.c.h.b16 %v766
        %v1081 = vunpack.c.l.b16 %v767
        %v1082 = vunpack.c.h.b16 %v767
        %v1083 = vunpack.c.l.b16 %v768
        %v1084 = vunpack.c.h.b16 %v768
        %v1085 = vunpack.c.l.b16 %v769
        %v1086 = vunpack.c.h.b16 %v769
        %v1087 = vunpack.c.l.b16 %v770
        %v1088 = vunpack.c.h.b16 %v770
        %v1089 = vunpack.c.l.b16 %v771
        %v1090 = vunpack.c.h.b16 %v771
        %v1091 = vunpack.c.l.b16 %v772
        %v1092 = vunpack.c.h.b16 %v772
        %v1093 = vunpack.c.l.b16 %v773
        %v1094 = vunpack.c.h.b16 %v773
        %v1095 = vunpack.c.l.b16 %v774
        %v1096 = vunpack.c.h.b16 %v774
        %v1097 = vunpack.c.l.b16 %v775
        %v1098 = vunpack.c.h.b16 %v775
        %v1099 = vunpack.c.l.b16 %v776
        %v1100 = vunpack.c.h.b16 %v776
        %v1101 = vunpack.c.l.b16 %v777
        %v1102 = vunpack.c.h.b16 %v777
        %v1103 = vunpack.c.l.b16 %v778
        %v1104 = vunpack.c.h.b16 %v778
        %v1105 = vunpack.c.l.b16 %v779
        %v1106 = vunpack.c.h.b16 %v779
        %v1107 = vunpack.c.l.b16 %v780
        %v1108 = vunpack.c.h.b16 %v780
        %v1109 = vunpack.c.l.b16 %v781
        %v1110 = vunpack.c.h.b16 %v781
        %v1111 = vunpack.c.l.b16 %v782
        %v1112 = vunpack.c.h.b16 %v782
        %v1113 = vunpack.c.l.b16 %v783
        %v1114 = vunpack.c.h.b16 %v783
        %v1115 = vunpack.c.l.b16 %v784
        %v1116 = vunpack.c.h.b16 %v784
        %v1117 = vunpack.c.l.b16 %v785
        %v1118 = vunpack.c.h.b16 %v785
        %v1119 = vunpack.c.l.b16 %v786
        %v1120 = vunpack.c.h.b16 %v786
        %v1121 = vunpack.c.l.b16 %v787
        %v1122 = vunpack.c.h.b16 %v787
        %v1123 = vunpack.c.l.b16 %v788
        %v1124 = vunpack.c.h.b16 %v788
        %v1125 = vunpack.c.l.b16 %v789
        %v1126 = vunpack.c.h.b16 %v789
        %v1127 = vunpack.c.l.b16 %v790
        %v1128 = vunpack.c.h.b16 %v790
        %v1129 = vunpack.c.l.b16 %v791
        %v1130 = vunpack.c.h.b16 %v791
        %v1131 = vunpack.c.l.b16 %v792
        %v1132 = vunpack.c.h.b16 %v792
        %v1133 = vunpack.c.l.b16 %v793
        %v1134 = vunpack.c.h.b16 %v793
        %v1135 = vunpack.c.l.b16 %v794
        %v1136 = vunpack.c.h.b16 %v794
        %v1137 = vunpack.c.l.b16 %v795
        %v1138 = vunpack.c.h.b16 %v795
        %v1139 = vunpack.c.l.b16 %v796
        %v1140 = vunpack.c.h.b16 %v796
        %v1141 = vunpack.c.l.b16 %v797
        %v1142 = vunpack.c.h.b16 %v797
        %v1143 = vunpack.c.l.b16 %v798
        %v1144 = vunpack.c.h.b16 %v798
        %v1145 = vunpack.c.l.b16 %v799
        %v1146 = vunpack.c.h.b16 %v799
        %v1147 = vunpack.c.l.b16 %v800
        %v1148 = vunpack.c.h.b16 %v800
        %v1149 = vunpack.c.l.b16 %v801
        %v1150 = vunpack.c.h.b16 %v801
        %v1151 = vunpack.c.l.b16 %v802
        %v1152 = vunpack.c.h.b16 %v802
        %v1153 = vunpack.c.l.b16 %v803
        %v1154 = vunpack.c.h.b16 %v803
        %v1155 = vunpack.c.l.b16 %v804
        %v1156 = vunpack.c.h.b16 %v804
        %v1157 = vunpack.c.l.b16 %v805
        %v1158 = vunpack.c.h.b16 %v805
        %v1159 = vunpack.c.l.b16 %v806
        %v1160 = vunpack.c.h.b16 %v806
        %v1161 = vunpack.c.l.b16 %v807
        %v1162 = vunpack.c.h.b16 %v807
        %v1163 = vunpack.c.l.b16 %v808
        %v1164 = vunpack.c.h.b16 %v808
        %v1165 = vunpack.c.l.b16 %v809
        %v1166 = vunpack.c.h.b16 %v809
        %v1167 = vunpack.c.l.b16 %v810
        %v1168 = vunpack.c.h.b16 %v810
        %v1169 = vunpack.c.l.b16 %v811
        %v1170 = vunpack.c.h.b16 %v811
        %v1171 = vunpack.c.l.b16 %v812
        %v1172 = vunpack.c.h.b16 %v812
        %v1173 = vunpack.c.l.b16 %v813
        %v1174 = vunpack.c.h.b16 %v813
        %v1175 = vunpack.c.l.b16 %v814
        %v1176 = vunpack.c.h.b16 %v814
        %v1177 = vunpack.c.l.b16 %v815
        %v1178 = vunpack.c.h.b16 %v815
        %v1179 = vunpack.c.l.b16 %v816
        %v1180 = vunpack.c.h.b16 %v816
        %v1181 = vunpack.c.l.b16 %v817
        %v1182 = vunpack.c.h.b16 %v817
        %v1183 = vunpack.c.l.b16 %v818
        %v1184 = vunpack.c.h.b16 %v818
        %v1185 = vunpack.c.l.b16 %v819
        %v1186 = vunpack.c.h.b16 %v819
        %v1187 = vunpack.c.l.b16 %v820
        %v1188 = vunpack.c.h.b16 %v820
        %v1189 = vunpack.c.l.b16 %v821
        %v1190 = vunpack.c.h.b16 %v821
        %v1191 = vunpack.c.l.b16 %v822
        %v1192 = vunpack.c.h.b16 %v822
        %v1193 = vunpack.c.l.b16 %v823
        %v1194 = vunpack.c.h.b16 %v823
        %v1195 = vunpack.c.l.b16 %v824
        %v1196 = vunpack.c.h.b16 %v824
        %v1197 = vunpack.c.l.b16 %v825
        %v1198 = vunpack.c.h.b16 %v825
        %v1199 = vunpack.c.l.b16 %v826
        %v1200 = vunpack.c.h.b16 %v826
        %v1201 = vunpack.c.l.b16 %v827
        %v1202 = vunpack.c.h.b16 %v827
        %v1203 = vunpack.c.l.b16 %v828
        %v1204 = vunpack.c.h.b16 %v828
        %v1205 = vunpack.c.l.b16 %v829
        %v1206 = vunpack.c.h.b16 %v829
        %v1207 = vunpack.c.l.b16 %v830
        %v1208 = vunpack.c.h.b16 %v830
        %v1209 = vunpack.c.l.b16 %v831
        %v1210 = vunpack.c.h.b16 %v831
        %v1211 = vunpack.c.l.b16 %v832
        %v1212 = vunpack.c.h.b16 %v832
        %v1213 = vunpack.c.l.b16 %v833
        %v1214 = vunpack.c.h.b16 %v833
        %v1215 = vunpack.c.l.b16 %v834
        %v1216 = vunpack.c.h.b16 %v834
        %v1217 = vunpack.c.l.b16 %v835
        %v1218 = vunpack.c.h.b16 %v835
        %v1219 = vunpack.c.l.b16 %v836
        %v1220 = vunpack.c.h.b16 %v836
        %v1221 = vunpack.c.l.b16 %v837
        %v1222 = vunpack.c.h.b16 %v837
        %v1223 = vunpack.c.l.b16 %v838
        %v1224 = vunpack.c.h.b16 %v838
        %v1225 = vunpack.c.l.b16 %v839
        %v1226 = vunpack.c.h.b16 %v839
        %v1227 = vunpack.c.l.b16 %v840
        %v1228 = vunpack.c.h.b16 %v840
        %v1229 = vunpack.c.l.b16 %v841
        %v1230 = vunpack.c.h.b16 %v841
        %v1231 = vunpack.c.l.b16 %v842
        %v1232 = vunpack.c.h.b16 %v842
        %v1233 = vunpack.c.l.b16 %v843
        %v1234 = vunpack.c.h.b16 %v843
        %v1235 = vunpack.c.l.b16 %v844
        %v1236 = vunpack.c.h.b16 %v844
        %v1237 = vunpack.c.l.b16 %v845
        %v1238 = vunpack.c.h.b16 %v845
        %v1239 = vunpack.c.l.b16 %v846
        %v1240 = vunpack.c.h.b16 %v846
        %v1241 = vunpack.c.l.b16 %v847
        %v1242 = vunpack.c.h.b16 %v847
        %v1243 = vunpack.c.l.b16 %v848
        %v1244 = vunpack.c.h.b16 %v848
        %v1245 = vunpack.c.l.b16 %v849
        %v1246 = vunpack.c.h.b16 %v849
        %v1247 = vunpack.c.l.b16 %v850
        %v1248 = vunpack.c.h.b16 %v850
        %v1249 = vunpack.c.l.b16 %v851
        %v1250 = vunpack.c.h.b16 %v851
        %v1251 = vunpack.c.l.b16 %v852
        %v1252 = vunpack.c.h.b16 %v852
        %v1253 = vunpack.c.l.b16 %v853
        %v1254 = vunpack.c.h.b16 %v853
        %v1255 = vunpack.c.l.b16 %v854
        %v1256 = vunpack.c.h.b16 %v854
        %v1257 = vunpack.c.l.b16 %v855
        %v1258 = vunpack.c.h.b16 %v855
        %v1259 = vunpack.c.l.b16 %v856
        %v1260 = vunpack.c.h.b16 %v856
        %v1261 = vunpack.c.l.b16 %v857
        %v1262 = vunpack.c.h.b16 %v857
        %v1263 = vunpack.c.l.b16 %v858
        %v1264 = vunpack.c.h.b16 %v858
        %v1265 = vunpack.c.l.b16 %v859
        %v1266 = vunpack.c.h.b16 %v859
        %v1267 = vunpack.c.l.b16 %v860
        %v1268 = vunpack.c.h.b16 %v860
        %v1269 = vunpack.c.l.b16 %v861
        %v1270 = vunpack.c.h.b16 %v861
        %v1271 = vunpack.c.l.b16 %v862
        %v1272 = vunpack.c.h.b16 %v862
        %v1273 = vunpack.c.l.b16 %v863
        %v1274 = vunpack.c.h.b16 %v863
        %v1275 = vunpack.c.l.b16 %v864
        %v1276 = vunpack.c.h.b16 %v864
        %v1277 = vunpack.c.l.b16 %v865
        %v1278 = vunpack.c.h.b16 %v865
        %v1279 = vunpack.c.l.b16 %v866
        %v1280 = vunpack.c.h.b16 %v866
        %v1281 = vunpack.c.l.b16 %v867
        %v1282 = vunpack.c.h.b16 %v867
        %v1283 = vunpack.c.l.b16 %v868
        %v1284 = vunpack.c.h.b16 %v868
        %v1285 = vunpack.c.l.b16 %v869
        %v1286 = vunpack.c.h.b16 %v869
        %v1287 = vunpack.c.l.b16 %v870
        %v1288 = vunpack.c.h.b16 %v870
        %v1289 = vunpack.c.l.b16 %v871
        %v1290 = vunpack.c.h.b16 %v871
        %v1291 = vunpack.c.l.b16 %v872
        %v1292 = vunpack.c.h.b16 %v872
        %v1293 = vpack.c.b16 %v1041, %v1037
        %v1294 = vpack.c.b16 %v1042, %v1038
        %v1295 = vpack.c.b16 %v1043, %v1039
        %v1296 = vpack.c.b16 %v1044, %v1040
        %v1297 = vpack.c.b16 %v1049, %v1045
        %v1298 = vpack.c.b16 %v1050, %v1046
        %v1299 = vpack.c.b16 %v1051, %v1047
        %v1300 = vpack.c.b16 %v1052, %v1048
        %v1301 = vpack.c.b16 %v1057, %v1053
        %v1302 = vpack.c.b16 %v1058, %v1054
        %v1303 = vpack.c.b16 %v1059, %v1055
        %v1304 = vpack.c.b16 %v1060, %v1056
        %v1305 = vpack.c.b16 %v1065, %v1061
        %v1306 = vpack.c.b16 %v1066, %v1062
        %v1307 = vpack.c.b16 %v1067, %v1063
        %v1308 = vpack.c.b16 %v1068, %v1064
        %v1309 = vpack.c.b16 %v1073, %v1069
        %v1310 = vpack.c.b16 %v1074, %v1070
        %v1311 = vpack.c.b16 %v1075, %v1071
        %v1312 = vpack.c.b16 %v1076, %v1072
        %v1313 = vpack.c.b16 %v1081, %v1077
        %v1314 = vpack.c.b16 %v1082, %v1078
        %v1315 = vpack.c.b16 %v1083, %v1079
        %v1316 = vpack.c.b16 %v1084, %v1080
        %v1317 = vpack.c.b16 %v1089, %v1085
        %v1318 = vpack.c.b16 %v1090, %v1086
        %v1319 = vpack.c.b16 %v1091, %v1087
        %v1320 = vpack.c.b16 %v1092, %v1088
        %v1321 = vpack.c.b16 %v1097, %v1093
        %v1322 = vpack.c.b16 %v1098, %v1094
        %v1323 = vpack.c.b16 %v1099, %v1095
        %v1324 = vpack.c.b16 %v1100, %v1096
        %v1325 = vpack.c.b16 %v1105, %v1101
        %v1326 = vpack.c.b16 %v1106, %v1102
        %v1327 = vpack.c.b16 %v1107, %v1103
        %v1328 = vpack.c.b16 %v1108, %v1104
        %v1329 = vpack.c.b16 %v1113, %v1109
        %v1330 = vpack.c.b16 %v1114, %v1110
        %v1331 = vpack.c.b16 %v1115, %v1111
        %v1332 = vpack.c.b16 %v1116, %v1112
        %v1333 = vpack.c.b16 %v1121, %v1117
        %v1334 = vpack.c.b16 %v1122, %v1118
        %v1335 = vpack.c.b16 %v1123, %v1119
        %v1336 = vpack.c.b16 %v1124, %v1120
        %v1337 = vpack.c.b16 %v1129, %v1125
        %v1338 = vpack.c.b16 %v1130, %v1126
        %v1339 = vpack.c.b16 %v1131, %v1127
        %v1340 = vpack.c.b16 %v1132, %v1128
        %v1341 = vpack.c.b16 %v1137, %v1133
        %v1342 = vpack.c.b16 %v1138, %v1134
        %v1343 = vpack.c.b16 %v1139, %v1135
        %v1344 = vpack.c.b16 %v1140, %v1136
        %v1345 = vpack.c.b16 %v1145, %v1141
        %v1346 = vpack.c.b16 %v1146, %v1142
        %v1347 = vpack.c.b16 %v1147, %v1143
        %v1348 = vpack.c.b16 %v1148, %v1144
        %v1349 = vpack.c.b16 %v1153, %v1149
        %v1350 = vpack.c.b16 %v1154, %v1150
        %v1351 = vpack.c.b16 %v1155, %v1151
        %v1352 = vpack.c.b16 %v1156, %v1152
        %v1353 = vpack.c.b16 %v1161, %v1157
        %v1354 = vpack.c.b16 %v1162, %v1158
        %v1355 = vpack.c.b16 %v1163, %v1159
        %v1356 = vpack.c.b16 %v1164, %v1160
        %v1357 = vpack.c.b16 %v1169, %v1165
        %v1358 = vpack.c.b16 %v1170, %v1166
        %v1359 = vpack.c.b16 %v1171, %v1167
        %v1360 = vpack.c.b16 %v1172, %v1168
        %v1361 = vpack.c.b16 %v1177, %v1173
        %v1362 = vpack.c.b16 %v1178, %v1174
        %v1363 = vpack.c.b16 %v1179, %v1175
        %v1364 = vpack.c.b16 %v1180, %v1176
        %v1365 = vpack.c.b16 %v1185, %v1181
        %v1366 = vpack.c.b16 %v1186, %v1182
        %v1367 = vpack.c.b16 %v1187, %v1183
        %v1368 = vpack.c.b16 %v1188, %v1184
        %v1369 = vpack.c.b16 %v1193, %v1189
        %v1370 = vpack.c.b16 %v1194, %v1190
        %v1371 = vpack.c.b16 %v1195, %v1191
        %v1372 = vpack.c.b16 %v1196, %v1192
        %v1373 = vpack.c.b16 %v1201, %v1197
        %v1374 = vpack.c.b16 %v1202, %v1198
        %v1375 = vpack.c.b16 %v1203, %v1199
        %v1376 = vpack.c.b16 %v1204, %v1200
        %v1377 = vpack.c.b16 %v1209, %v1205
        %v1378 = vpack.c.b16 %v1210, %v1206
        %v1379 = vpack.c.b16 %v1211, %v1207
        %v1380 = vpack.c.b16 %v1212, %v1208
        %v1381 = vpack.c.b16 %v1217, %v1213
        %v1382 = vpack.c.b16 %v1218, %v1214
        %v1383 = vpack.c.b16 %v1219, %v1215
        %v1384 = vpack.c.b16 %v1220, %v1216
        %v1385 = vpack.c.b16 %v1225, %v1221
        %v1386 = vpack.c.b16 %v1226, %v1222
        %v1387 = vpack.c.b16 %v1227, %v1223
        %v1388 = vpack.c.b16 %v1228, %v1224
        %v1389 = vpack.c.b16 %v1233, %v1229
        %v1390 = vpack.c.b16 %v1234, %v1230
        %v1391 = vpack.c.b16 %v1235, %v1231
        %v1392 = vpack.c.b16 %v1236, %v1232
        %v1393 = vpack.c.b16 %v1241, %v1237
        %v1394 = vpack.c.b16 %v1242, %v1238
        %v1395 = vpack.c.b16 %v1243, %v1239
        %v1396 = vpack.c.b16 %v1244, %v1240
        %v1397 = vpack.c.b16 %v1249, %v1245
        %v1398 = vpack.c.b16 %v1250, %v1246
        %v1399 = vpack.c.b16 %v1251, %v1247
        %v1400 = vpack.c.b16 %v1252, %v1248
        %v1401 = vpack.c.b16 %v1257, %v1253
        %v1402 = vpack.c.b16 %v1258, %v1254
        %v1403 = vpack.c.b16 %v1259, %v1255
        %v1404 = vpack.c.b16 %v1260, %v1256
        %v1405 = vpack.c.b16 %v1265, %v1261
        %v1406 = vpack.c.b16 %v1266, %v1262
        %v1407 = vpack.c.b16 %v1267, %v1263
        %v1408 = vpack.c.b16 %v1268, %v1264
        %v1409 = vpack.c.b16 %v1273, %v1269
        %v1410 = vpack.c.b16 %v1274, %v1270
        %v1411 = vpack.c.b16 %v1275, %v1271
        %v1412 = vpack.c.b16 %v1276, %v1272
        %v1413 = vpack.c.b16 %v1281, %v1277
        %v1414 = vpack.c.b16 %v1282, %v1278
        %v1415 = vpack.c.b16 %v1283, %v1279
        %v1416 = vpack.c.b16 %v1284, %v1280
        %v1417 = vpack.c.b16 %v1289, %v1285
        %v1418 = vpack.c.b16 %v1290, %v1286
        %v1419 = vpack.c.b16 %v1291, %v1287
        %v1420 = vpack.c.b16 %v1292, %v1288
        %1549 = vmatprep.subr.bf16.mxu0 %v1294
        %1550 = vmatpush1.bf16.msra.mxu0 %v1293
        %1551 = vmatprep.subr.bf16.mxu0 %v1298
        %1552 = vmatpush1.bf16.msra.mxu0 %v1297
        %1553 = vmatprep.subr.bf16.mxu0 %v1302
        %1554 = vmatpush1.bf16.msra.mxu0 %v1301
        %1555 = vmatprep.subr.bf16.mxu0 %v1306
        %1556 = vmatpush1.bf16.msra.mxu0 %v1305
        %1557 = vmatprep.subr.bf16.mxu0 %v1310
        %1558 = vmatpush1.bf16.msra.mxu0 %v1309
        %1559 = vmatprep.subr.bf16.mxu0 %v1314
        %1560 = vmatpush1.bf16.msra.mxu0 %v1313
        %1561 = vmatprep.subr.bf16.mxu0 %v1318
        %1562 = vmatpush1.bf16.msra.mxu0 %v1317
        %1563 = vmatprep.subr.bf16.mxu0 %v1322
        %1564 = vmatpush1.bf16.msra.mxu0 %v1321
        %1565 = vmatprep.subr.bf16.mxu0 %v1326
        %1566 = vmatpush1.bf16.msra.mxu0 %v1325
        %1567 = vmatprep.subr.bf16.mxu0 %v1330
        %1568 = vmatpush1.bf16.msra.mxu0 %v1329
        %1569 = vmatprep.subr.bf16.mxu0 %v1334
        %1570 = vmatpush1.bf16.msra.mxu0 %v1333
        %1571 = vmatprep.subr.bf16.mxu0 %v1338
        %1572 = vmatpush1.bf16.msra.mxu0 %v1337
        %1573 = vmatprep.subr.bf16.mxu0 %v1342
        %1574 = vmatpush1.bf16.msra.mxu0 %v1341
        %1575 = vmatprep.subr.bf16.mxu0 %v1346
        %1576 = vmatpush1.bf16.msra.mxu0 %v1345
        %1577 = vmatprep.subr.bf16.mxu0 %v1350
        %1578 = vmatpush1.bf16.msra.mxu0 %v1349
        %1579 = vmatprep.subr.bf16.mxu0 %v1354
        %1580 = vmatpush1.bf16.msra.mxu0 %v1353
        %1581 = vmatprep.mubr.bf16.mxu0 %v902
        %1582 = vmatmul.mubr.bf16.gmra.mrb[0].mxu0 %v901
        %v1583 = vpop.f32.mrb[0].mxu0
        %v1584 = vadd.f32 %v878, %v1583
        %v1585 = vpop.f32.mrb[0].mxu0
        %v1586 = vadd.f32 %v882, %v1585
        %v1587 = vpop.f32.mrb[0].mxu0
        %v1588 = vpop.f32.mrb[0].mxu0
        %1589 = vdwg.mxu0
        %1590 = vmatprep.subr.bf16.mxu0 %v1358
        %1591 = vmatpush1.bf16.msra.mxu0 %v1357
        %1592 = vmatprep.subr.bf16.mxu0 %v1362
        %1593 = vmatpush1.bf16.msra.mxu0 %v1361
        %1594 = vmatprep.subr.bf16.mxu0 %v1366
        %1595 = vmatpush1.bf16.msra.mxu0 %v1365
        %1596 = vmatprep.subr.bf16.mxu0 %v1370
        %1597 = vmatpush1.bf16.msra.mxu0 %v1369
        %1598 = vmatprep.subr.bf16.mxu0 %v1374
        %1599 = vmatpush1.bf16.msra.mxu0 %v1373
        %1600 = vmatprep.subr.bf16.mxu0 %v1378
        %1601 = vmatpush1.bf16.msra.mxu0 %v1377
        %1602 = vmatprep.subr.bf16.mxu0 %v1382
        %1603 = vmatpush1.bf16.msra.mxu0 %v1381
        %1604 = vmatprep.subr.bf16.mxu0 %v1386
        %1605 = vmatpush1.bf16.msra.mxu0 %v1385
        %1606 = vmatprep.subr.bf16.mxu0 %v1390
        %1607 = vmatpush1.bf16.msra.mxu0 %v1389
        %1608 = vmatprep.subr.bf16.mxu0 %v1394
        %1609 = vmatpush1.bf16.msra.mxu0 %v1393
        %1610 = vmatprep.subr.bf16.mxu0 %v1398
        %1611 = vmatpush1.bf16.msra.mxu0 %v1397
        %1612 = vmatprep.subr.bf16.mxu0 %v1402
        %1613 = vmatpush1.bf16.msra.mxu0 %v1401
        %1614 = vmatprep.subr.bf16.mxu0 %v1406
        %1615 = vmatpush1.bf16.msra.mxu0 %v1405
        %1616 = vmatprep.subr.bf16.mxu0 %v1410
        %1617 = vmatpush1.bf16.msra.mxu0 %v1409
        %1618 = vmatprep.subr.bf16.mxu0 %v1414
        %1619 = vmatpush1.bf16.msra.mxu0 %v1413
        %1620 = vmatprep.subr.bf16.mxu0 %v1418
        %1621 = vmatpush1.bf16.msra.mxu0 %v1417
        %1622 = vmatprep.mubr.bf16.mxu0 %v904
        %1623 = vmatmul.mubr.bf16.gmra.mrb[0].mxu0 %v903
        %v1624 = vpop.f32.mrb[0].mxu0
        %v1625 = vadd.f32 %v1584, %v1624
        %v1626 = vpop.f32.mrb[0].mxu0
        %v1627 = vadd.f32 %v1586, %v1626
        %v1628 = vpop.f32.mrb[0].mxu0
        %v1629 = vpop.f32.mrb[0].mxu0
        %1630 = vdwg.mxu0
        %1631 = vmatprep.subr.bf16.mxu0 %v1296
        %1632 = vmatpush1.bf16.msra.mxu0 %v1295
        %1633 = vmatprep.subr.bf16.mxu0 %v1300
        %1634 = vmatpush1.bf16.msra.mxu0 %v1299
        %1635 = vmatprep.subr.bf16.mxu0 %v1304
        %1636 = vmatpush1.bf16.msra.mxu0 %v1303
        %1637 = vmatprep.subr.bf16.mxu0 %v1308
        %1638 = vmatpush1.bf16.msra.mxu0 %v1307
        %1639 = vmatprep.subr.bf16.mxu0 %v1312
        %1640 = vmatpush1.bf16.msra.mxu0 %v1311
        %1641 = vmatprep.subr.bf16.mxu0 %v1316
        %1642 = vmatpush1.bf16.msra.mxu0 %v1315
        %1643 = vmatprep.subr.bf16.mxu0 %v1320
        %1644 = vmatpush1.bf16.msra.mxu0 %v1319
        %1645 = vmatprep.subr.bf16.mxu0 %v1324
        %1646 = vmatpush1.bf16.msra.mxu0 %v1323
        %1647 = vmatprep.subr.bf16.mxu0 %v1328
        %1648 = vmatpush1.bf16.msra.mxu0 %v1327
        %1649 = vmatprep.subr.bf16.mxu0 %v1332
        %1650 = vmatpush1.bf16.msra.mxu0 %v1331
        %1651 = vmatprep.subr.bf16.mxu0 %v1336
        %1652 = vmatpush1.bf16.msra.mxu0 %v1335
        %1653 = vmatprep.subr.bf16.mxu0 %v1340
        %1654 = vmatpush1.bf16.msra.mxu0 %v1339
        %1655 = vmatprep.subr.bf16.mxu0 %v1344
        %1656 = vmatpush1.bf16.msra.mxu0 %v1343
        %1657 = vmatprep.subr.bf16.mxu0 %v1348
        %1658 = vmatpush1.bf16.msra.mxu0 %v1347
        %1659 = vmatprep.subr.bf16.mxu0 %v1352
        %1660 = vmatpush1.bf16.msra.mxu0 %v1351
        %1661 = vmatprep.subr.bf16.mxu0 %v1356
        %1662 = vmatpush1.bf16.msra.mxu0 %v1355
        %1663 = vmatprep.mubr.bf16.mxu0 %v902
        %1664 = vmatmul.mubr.bf16.gmra.mrb[0].mxu0 %v901
        %v1665 = vpop.f32.mrb[0].mxu0
        %v1666 = vadd.f32 %v886, %v1665
        %v1667 = vpop.f32.mrb[0].mxu0
        %v1668 = vadd.f32 %v890, %v1667
        %v1669 = vpop.f32.mrb[0].mxu0
        %v1670 = vpop.f32.mrb[0].mxu0
        %1671 = vdwg.mxu0
        %1672 = vmatprep.subr.bf16.mxu0 %v1360
        %1673 = vmatpush1.bf16.msra.mxu0 %v1359
        %1674 = vmatprep.subr.bf16.mxu0 %v1364
        %1675 = vmatpush1.bf16.msra.mxu0 %v1363
        %1676 = vmatprep.subr.bf16.mxu0 %v1368
        %1677 = vmatpush1.bf16.msra.mxu0 %v1367
        %1678 = vmatprep.subr.bf16.mxu0 %v1372
        %1679 = vmatpush1.bf16.msra.mxu0 %v1371
        %1680 = vmatprep.subr.bf16.mxu0 %v1376
        %1681 = vmatpush1.bf16.msra.mxu0 %v1375
        %1682 = vmatprep.subr.bf16.mxu0 %v1380
        %1683 = vmatpush1.bf16.msra.mxu0 %v1379
        %1684 = vmatprep.subr.bf16.mxu0 %v1384
        %1685 = vmatpush1.bf16.msra.mxu0 %v1383
        %1686 = vmatprep.subr.bf16.mxu0 %v1388
        %1687 = vmatpush1.bf16.msra.mxu0 %v1387
        %1688 = vmatprep.subr.bf16.mxu0 %v1392
        %1689 = vmatpush1.bf16.msra.mxu0 %v1391
        %1690 = vmatprep.subr.bf16.mxu0 %v1396
        %1691 = vmatpush1.bf16.msra.mxu0 %v1395
        %1692 = vmatprep.subr.bf16.mxu0 %v1400
        %1693 = vmatpush1.bf16.msra.mxu0 %v1399
        %1694 = vmatprep.subr.bf16.mxu0 %v1404
        %1695 = vmatpush1.bf16.msra.mxu0 %v1403
        %1696 = vmatprep.subr.bf16.mxu0 %v1408
        %1697 = vmatpush1.bf16.msra.mxu0 %v1407
        %1698 = vmatprep.subr.bf16.mxu0 %v1412
        %1699 = vmatpush1.bf16.msra.mxu0 %v1411
        %1700 = vmatprep.subr.bf16.mxu0 %v1416
        %1701 = vmatpush1.bf16.msra.mxu0 %v1415
        %1702 = vmatprep.subr.bf16.mxu0 %v1420
        %1703 = vmatpush1.bf16.msra.mxu0 %v1419
        %1704 = vmatprep.mubr.bf16.mxu0 %v904
        %1705 = vmatmul.mubr.bf16.gmra.mrb[0].mxu0 %v903
        %v1706 = vpop.f32.mrb[0].mxu0
        %v1707 = vadd.f32 %v1666, %v1706
        %v1708 = vpop.f32.mrb[0].mxu0
        %v1709 = vadd.f32 %v1668, %v1708
        %v1710 = vpop.f32.mrb[0].mxu0
        %v1711 = vpop.f32.mrb[0].mxu0
        %1712 = vdwg.mxu0
        %v1713 = vxor.u32 %v1625, 2147483648
        %v1714 = vxor.u32 %v1627, 2147483648
        %v1715 = vxor.u32 %v1707, 2147483648
        %v1716 = vxor.u32 %v1709, 2147483648
        %v1717 = vmul.f32 %v1713, 1.442695
        %v1718 = vpow.pop %v1717
        %v1719 = vmul.f32 %v1714, 1.442695
        %v1720 = vpow.pop %v1719
        %v1721 = vmul.f32 %v1715, 1.442695
        %v1722 = vpow.pop %v1721
        %v1723 = vmul.f32 %v1716, 1.442695
        %v1724 = vpow.pop %v1723
        %v1725 = vadd.f32 %v1718, 1.0
        %v1726 = vadd.f32 %v1720, 1.0
        %v1727 = vadd.f32 %v1722, 1.0
        %v1728 = vadd.f32 %v1724, 1.0
        %v1729 = vrcp.pop %v1725
        %v1730 = vmul.f32 1.0, %v1729
        %v1731 = vrcp.pop %v1726
        %v1732 = vmul.f32 1.0, %v1731
        %v1733 = vrcp.pop %v1727
        %v1734 = vmul.f32 1.0, %v1733
        %v1735 = vrcp.pop %v1728
        %v1736 = vmul.f32 1.0, %v1735
        %1737 = vst [vmem:[%s557] sm:$0xff] %v1730
        %1738 = vst [vmem:[%s557 + $0x8] sm:$0xff] %v1732
        %1739 = vst [vmem:[%s557 + $0x10] sm:$0xff] %v1734
        %1740 = vst [vmem:[%s557 + $0x18] sm:$0xff] %v1736
        %s1741 = smul.u32 4, %s21
        %p1742 = scmp.lt.s32.totalorder %s20, 0
        %s1743 = scalar_select %p1742, %s20, 0
        %p1744 = scmp.lt.s32.totalorder %s1741, 7
        %s1745 = scalar_select %p1744, %s1741, 7
        %s1746 = smul.addr %s1743, 8
        %s1747 = sadd.s32 %s1745, %s1746
        %s1748 = smul.addr %s1747, 8
        %s1749 = scalar_lea.vmem %s5, %s1748
        // Predicated region
        $region68: #{decoder_forward.1} parent=58 // pred_check
          %p1750 = pneg %p168
        $region69: #{decoder_forward.1} parent=58 // pred_check_branch
          %1752 = sbr.rel (%p1750) target = $region71
        $region70: #{decoder_forward.1} parent=58 // pred_region
          %s1753 = smul.u32 4, %s21
        $region71: #{decoder_forward.1} parent=58 // pred_fallthru
          _
      $region59: #{decoder_forward.1} parent=5 // pred_fallthru
        _
      %p1754 = scmp.le.s32.totalorder 2, %s11
      // Predicated region
      $region72: #{decoder_forward.1} parent=5 // pred_check
        %p1755 = pneg %p1754
      $region73: #{decoder_forward.1} parent=5 // pred_check_branch
        %1757 = sbr.rel (%p1755) target = $region75
      $region74: #{decoder_forward.1} parent=5 // pred_region
        %s1758 = ssub.s32 %s11, 2
        // Predicated region
        $region76: #{decoder_forward.1} parent=74 // pred_check
          %p1759 = pneg %p174
        $region77: #{decoder_forward.1} parent=74 // pred_check_branch
          %1761 = sbr.rel (%p1759) target = $region79
        $region78: #{decoder_forward.1} parent=74 // pred_region
          %s1762 = smul.u32 4, %s23
          %p1763 = scmp.lt.s32.totalorder %s22, 0
          %s1764 = scalar_select %p1763, %s22, 0
          %p1765 = scmp.lt.s32.totalorder %s1762, 7
          %s1766 = scalar_select %p1765, %s1762, 7
          %s1767 = smul.addr %s1764, 8
          %s1768 = sadd.s32 %s1766, %s1767
          %s1769 = smul.addr %s1768, 8
          %s1770 = scalar_lea.vmem %s5, %s1769
        $region79: #{decoder_forward.1} parent=74 // pred_fallthru
          _
      $region75: #{decoder_forward.1} parent=5 // pred_fallthru
        _
    $region6: #{decoder_forward.1} parent=1 // loop_footer
      %s15 = sadd.s32 1, %s11
    $region7: #{decoder_forward.1} parent=1 // loop_footer_branch
      %10 = sbr.rel target = $region3
    $region8: #{decoder_forward.1} parent=1 // loop_exit
      _

</llo_original>
